<compile_context>
chip_gen: v5e
topology: v5e:2x2
jax: 0.10.0
libtpu: 0.0.40
codegen_flags: <defaults>
</compile_context>

<pallas_src>
import functools
import math

import jax
import jax.numpy as jnp
from jax.experimental import pallas as pl
from jax.experimental.pallas import tpu as pltpu


def _round_up(x, m):
    return ((x + m - 1) // m) * m


def _softplus(x):
    # numerically-stable log(1 + exp(x)) == torch.nn.Softplus()
    return jnp.logaddexp(x, 0.0)


def vae_kernel(
    # inputs
    x_ref, eps_ref,
    w_enc_ref, b_enc_ref,
    w_heads_ref, b_heads_ref,
    w_dec_ref, b_dec_ref,
    w_pmu_ref, b_pmu_ref,
    # outputs
    x_mean_ref, small_ref,
    *, z_size, head_width,
):
    x = x_ref[...]          # (TB, D_in)  bf16
    eps = eps_ref[...]      # (TB, W)     f32, zeros beyond lane z_size

    # ---------- encoder: h = tanh(x @ W_enc + b_enc)   (bf16 x bf16 -> f32 accum)
    h = jnp.tanh(
        jnp.dot(x, w_enc_ref[...], preferred_element_type=jnp.float32)
        + b_enc_ref[...]
    )

    # ---------- fused mu/var heads, lane-dense width W: [0:Z]=mu, [Z:2Z]=var_pre, rest 0
    heads = (
        jnp.dot(h.astype(jnp.bfloat16), w_heads_ref[...],
                preferred_element_type=jnp.float32)
        + b_heads_ref[...]
    )

    # align var_pre onto lanes [0:Z) with an XLU rotate (no sub-lane slicing)
    var_pre = pltpu.roll(heads, head_width - z_size, 1)
    # nn.Softplus() followed by nn.Hardtanh(min_val=0.0001, max_val=5.0)
    var = jnp.clip(_softplus(var_pre), 0.0001, 5.0)

    # ---------- reparameterize at full lane width: z = eps * sqrt(var) + mu
    # eps is zero beyond lane z_size, so lanes >= z_size just carry inert values.
    z = eps * jnp.sqrt(var) + heads        # heads lanes [0:Z) hold mu

    # ---------- decoder: w_dec rows >= z_size are zero, so garbage lanes of z are inert
    hd = jnp.tanh(
        jnp.dot(z.astype(jnp.bfloat16), w_dec_ref[...],
                preferred_element_type=jnp.float32)
        + b_dec_ref[...]
    )
    logits = (
        jnp.dot(hd.astype(jnp.bfloat16), w_pmu_ref[...],
                preferred_element_type=jnp.float32)
        + b_pmu_ref[...]
    )
    x_mean_ref[...] = jax.nn.sigmoid(logits).astype(x_mean_ref.dtype)

    # ---------- pack [mu | var | z | 0...] into one lane-dense slab: rolls + lane masks
    lane = jax.lax.broadcasted_iota(jnp.int32, heads.shape, 1)
    var_slab = pltpu.roll(var, z_size, 1)        # var -> lanes [Z:2Z)
    z_slab = pltpu.roll(z, 2 * z_size, 1)        # z   -> lanes [2Z:3Z)
    slab = jnp.where(lane < z_size, heads,                       # mu at [0:Z)
           jnp.where(lane < 2 * z_size, var_slab,
           jnp.where(lane < 3 * z_size, z_slab, 0.0)))
    small_ref[...] = slab                        # single unmasked full-width store


def _choose_batch_tile(batch):
    """Minimal padding for small batches; big tiles (grid >= 2) for large ones."""
    granule = 16  # bf16 sublane-packing granule for the x / x_mean tiles
    if batch <= 256:
        return _round_up(batch, granule)
    for tb in (512, 256, 128):          # largest tile that still gives >= 2 grid steps
        if batch >= 2 * tb:
            return tb
    return 128


def _physical_vmem_bytes():
    try:
        info = pltpu.get_tpu_info()
        cap = getattr(info, "vmem_capacity_bytes", None)
        if cap:
            return int(cap)
    except Exception:
        pass
    return 64 << 20   # conservative default (v7x per-core VMEM)


def vae_forward(x_nchw, eps, params, *, z_size, input_size, batch_tile=None):
    assert z_size >= 1
    B = x_nchw.shape[0]
    # bf16 input stream: halves the dominant x DMA and removes the in-kernel cast
    x_flat = x_nchw.reshape(B, -1).astype(jnp.bfloat16)
    D_in = x_flat.shape[1]

    # lane-dense width covering both the fused heads and the packed [mu|var|z] slab
    head_width = _round_up(max(3 * z_size, 1), 128)

    TB = batch_tile if batch_tile is not None else _choose_batch_tile(B)
    B_pad = _round_up(B, TB)
    grid = (B_pad // TB,)

    if B_pad != B:
        x_flat = jnp.pad(x_flat, ((0, B_pad - B), (0, 0)))
    eps_pad = jnp.pad(eps.astype(jnp.float32),
                      ((0, B_pad - B), (0, head_width - z_size)))

    enc_dim = params["w_enc"].shape[1]
    dec_dim = params["w_dec"].shape[1]

    # fused mu/var head padded to lane-dense width (bf16 on the MXU, f32 biases)
    w_heads = jnp.zeros((enc_dim, head_width), jnp.float32)
    w_heads = w_heads.at[:, 0:z_size].set(params["w_mu"].astype(jnp.float32))
    w_heads = w_heads.at[:, z_size:2 * z_size].set(params["w_var"].astype(jnp.float32))
    b_heads = jnp.zeros((1, head_width), jnp.float32)
    b_heads = b_heads.at[:, 0:z_size].set(params["b_mu"].astype(jnp.float32))
    b_heads = b_heads.at[:, z_size:2 * z_size].set(params["b_var"].astype(jnp.float32))

    # decoder weight zero-padded to K = head_width (z lanes beyond z_size are inert)
    w_dec = jnp.zeros((head_width, dec_dim), jnp.float32)
    w_dec = w_dec.at[0:z_size].set(params["w_dec"].astype(jnp.float32))

    inputs = [
        x_flat, eps_pad,
        params["w_enc"].astype(jnp.bfloat16), params["b_enc"].astype(jnp.float32),
        w_heads.astype(jnp.bfloat16), b_heads,
        w_dec.astype(jnp.bfloat16), params["b_dec"].astype(jnp.float32),
        params["w_pmu"].astype(jnp.bfloat16), params["b_pmu"].astype(jnp.float32),
    ]

    # --- BlockSpecs: batch-tiled data/outputs, resident (constant-block) weights ---
    def batch_spec(cols):
        return pl.BlockSpec((TB, cols), lambda i: (i, 0))

    def resident_spec(arr):
        return pl.BlockSpec(arr.shape, lambda i: (0, 0))

    in_specs = [batch_spec(D_in), batch_spec(head_width)] + [
        resident_spec(a) for a in inputs[2:]
    ]

    out_shapes = (
        jax.ShapeDtypeStruct((B_pad, D_in), jnp.bfloat16),        # x_mean (flat, bf16)
        jax.ShapeDtypeStruct((B_pad, head_width), jnp.float32),   # packed [mu | var | z]
    )
    out_specs = (batch_spec(D_in), batch_spec(head_width))

    # --- VMEM budget with generation-aware cap ---
    def nbytes(a):
        return a.size * a.dtype.itemsize

    weight_bytes = sum(nbytes(a) for a in inputs[2:])
    tile_bytes = (TB * D_in * 2) + (TB * head_width * 4) \
               + (TB * D_in * 2) + (TB * head_width * 4)
    budget = 2 * weight_bytes + 2 * tile_bytes + (6 << 20)
    phys = _physical_vmem_bytes()
    # ~56 MiB on v7x (64 MiB phys, leave headroom), up to ~100 MiB on v5e/v6e (128 MiB)
    cap = min(max(phys - (8 << 20), 16 << 20), 100 << 20)
    vmem_limit = int(max(8 << 20, min(budget, cap)))

    flops = 2 * B_pad * (D_in * enc_dim + enc_dim * head_width
                         + head_width * dec_dim + dec_dim * D_in)
    transcendentals = B_pad * (enc_dim + 2 * head_width + dec_dim + D_in)
    bytes_accessed = sum(nbytes(a) for a in inputs) \
                   + B_pad * D_in * 2 + B_pad * head_width * 4

    kernel = functools.partial(vae_kernel, z_size=z_size, head_width=head_width)

    x_mean_flat, small = pl.pallas_call(
        kernel,
        grid=grid,
        in_specs=in_specs,
        out_specs=out_specs,
        out_shape=out_shapes,
        compiler_params=pltpu.CompilerParams(
            dimension_semantics=("parallel",),
            vmem_limit_bytes=vmem_limit,
        ),
        cost_estimate=pl.CostEstimate(
            flops=int(flops),
            transcendentals=int(transcendentals),
            bytes_accessed=int(bytes_accessed),
        ),
    )(*inputs)

    x_mean = x_mean_flat[:B].reshape((-1,) + tuple(input_size))
    mu = small[:B, 0:z_size]
    var = small[:B, z_size:2 * z_size]
    z = small[:B, 2 * z_size:3 * z_size]
    log_det_j = jnp.zeros((), jnp.float32)   # plain VAE: zero log-det; z_0 = z_k = z
    return x_mean, mu, var, log_det_j, z, z


def vae_reference(x_nchw, eps, params, *, z_size, input_size):
    """Pure-JAX reference mirroring the kernel's bf16-on-MXU / f32-accum numerics."""
    bf, f32 = jnp.bfloat16, jnp.float32
    B = x_nchw.shape[0]
    xf = x_nchw.reshape(B, -1).astype(bf)
    h = jnp.tanh(jnp.dot(xf, params["w_enc"].astype(bf),
                         preferred_element_type=f32) + params["b_enc"])
    hb = h.astype(bf)
    mu = jnp.dot(hb, params["w_mu"].astype(bf), preferred_element_type=f32) + params["b_mu"]
    var_pre = jnp.dot(hb, params["w_var"].astype(bf), preferred_element_type=f32) + params["b_var"]
    var = jnp.clip(jnp.logaddexp(var_pre, 0.0), 0.0001, 5.0)
    z = eps.astype(f32) * jnp.sqrt(var) + mu
    hd = jnp.tanh(jnp.dot(z.astype(bf), params["w_dec"].astype(bf),
                          preferred_element_type=f32) + params["b_dec"])
    logits = jnp.dot(hd.astype(bf), params["w_pmu"].astype(bf),
                     preferred_element_type=f32) + params["b_pmu"]
    x_mean = jax.nn.sigmoid(logits)
    return x_mean.reshape((-1,) + tuple(input_size)), mu, var, z


def init_params(key, *, input_dim, encoder_dim, decoder_dim, z_size):
    """Deterministic synthetic parameter init (nn.Linear weights stored as (in, out))."""
    keys = jax.random.split(key, 5)
    scale = 0.1  # enough dynamic range that mu / var / z are non-degenerate

    def lin(k, fan_in, fan_out):
        kw, kb = jax.random.split(k)
        w = scale * jax.random.normal(kw, (fan_in, fan_out), jnp.float32)
        b = scale * jax.random.normal(kb, (1, fan_out), jnp.float32)
        return w, b

    p = {}
    p["w_enc"], p["b_enc"] = lin(keys[0], input_dim, encoder_dim)
    p["w_mu"], p["b_mu"] = lin(keys[1], encoder_dim, z_size)
    p["w_var"], p["b_var"] = lin(keys[2], encoder_dim, z_size)
    p["w_dec"], p["b_dec"] = lin(keys[3], z_size, decoder_dim)
    p["w_pmu"], p["b_pmu"] = lin(keys[4], decoder_dim, input_dim)
    return p


if __name__ == "__main__":
    # Small, self-consistent config
    B = 2
    input_size = (4, 16, 16)          # C, H, W
    input_dim = int(math.prod(input_size))
    encoder_dim = 64
    decoder_dim = 64
    z_size = 8

    root = jax.random.PRNGKey(0)
    k_x, k_eps, k_params = jax.random.split(root, 3)

    x = jax.random.uniform(k_x, (B,) + input_size, jnp.float32)    # NCHW input
    eps = jax.random.normal(k_eps, (B, z_size), jnp.float32)       # reparam noise
    params = init_params(
        k_params,
        input_dim=input_dim,
        encoder_dim=encoder_dim,
        decoder_dim=decoder_dim,
        z_size=z_size,
    )

    outs = jax.block_until_ready(
        vae_forward(x, eps, params, z_size=z_size, input_size=input_size))
    x_mean, z_mu, z_var, log_det_j, z0, zk = outs

    assert x_mean.shape == (B,) + input_size
    assert z_mu.shape == (B, z_size) and z_var.shape == (B, z_size)
    assert z0.shape == (B, z_size) and zk.shape == (B, z_size)
    assert float(jnp.max(jnp.abs(z0 - zk))) == 0.0
    assert float(log_det_j) == 0.0
    assert bool(jnp.all(jnp.isfinite(x_mean.astype(jnp.float32))))
    assert bool(jnp.all((z_var >= 0.0001 - 1e-6) & (z_var <= 5.0 + 1e-6)))

    # Correctness vs a pure-JAX reference with matching bf16 matmul numerics.
    ref_x_mean, ref_mu, ref_var, ref_z = vae_reference(
        x, eps, params, z_size=z_size, input_size=input_size)
    assert bool(jnp.allclose(x_mean.astype(jnp.float32), ref_x_mean, atol=2e-2, rtol=2e-2))
    assert bool(jnp.allclose(z_mu, ref_mu, atol=2e-2, rtol=2e-2))
    assert bool(jnp.allclose(z_var, ref_var, atol=2e-2, rtol=2e-2))
    assert bool(jnp.allclose(z0, ref_z, atol=2e-2, rtol=2e-2))

    print("KERNEL_OK")
</pallas_src>

<mosaic_0001>
module attributes {stable_mosaic.version = 11 : i64} {
  func.func @vae_kernel(%arg0: i32, %arg1: memref<16x1024xbf16, #tpu.memory_space<vmem>>, %arg2: memref<16x128xf32, #tpu.memory_space<vmem>>, %arg3: memref<1024x64xbf16, #tpu.memory_space<vmem>>, %arg4: memref<1x64xf32, #tpu.memory_space<vmem>>, %arg5: memref<64x128xbf16, #tpu.memory_space<vmem>>, %arg6: memref<1x128xf32, #tpu.memory_space<vmem>>, %arg7: memref<128x64xbf16, #tpu.memory_space<vmem>>, %arg8: memref<1x64xf32, #tpu.memory_space<vmem>>, %arg9: memref<64x1024xbf16, #tpu.memory_space<vmem>>, %arg10: memref<1x1024xf32, #tpu.memory_space<vmem>>, %arg11: memref<16x1024xbf16, #tpu.memory_space<vmem>>, %arg12: memref<16x128xf32, #tpu.memory_space<vmem>>) attributes {dimension_semantics = [#tpu.dimension_semantics<parallel>], iteration_bounds = array<i64: 1>, scalar_prefetch = 0 : i64, scratch_operands = 0 : i64, tpu.core_type = #tpu.core_type<tc>, window_params = [{transform_indices = @transform_0, window_bounds = array<i64: 16, 1024>}, {transform_indices = @transform_1, window_bounds = array<i64: 16, 128>}, {pipeline_mode = #tpu.pipeline_mode<synchronous>, transform_indices = @transform_2, window_bounds = array<i64: 1024, 64>}, {pipeline_mode = #tpu.pipeline_mode<synchronous>, transform_indices = @transform_3, window_bounds = array<i64: 1, 64>}, {pipeline_mode = #tpu.pipeline_mode<synchronous>, transform_indices = @transform_4, window_bounds = array<i64: 64, 128>}, {pipeline_mode = #tpu.pipeline_mode<synchronous>, transform_indices = @transform_5, window_bounds = array<i64: 1, 128>}, {pipeline_mode = #tpu.pipeline_mode<synchronous>, transform_indices = @transform_6, window_bounds = array<i64: 128, 64>}, {pipeline_mode = #tpu.pipeline_mode<synchronous>, transform_indices = @transform_7, window_bounds = array<i64: 1, 64>}, {pipeline_mode = #tpu.pipeline_mode<synchronous>, transform_indices = @transform_8, window_bounds = array<i64: 64, 1024>}, {pipeline_mode = #tpu.pipeline_mode<synchronous>, transform_indices = @transform_9, window_bounds = array<i64: 1, 1024>}, {transform_indices = @transform_10, window_bounds = array<i64: 16, 1024>}, {transform_indices = @transform_11, window_bounds = array<i64: 16, 128>}]} {
    %c0 = arith.constant 0 : index
    %c0_0 = arith.constant 0 : index
    %0 = vector.load %arg1[%c0, %c0_0] : memref<16x1024xbf16, #tpu.memory_space<vmem>>, vector<16x1024xbf16>
    %c0_1 = arith.constant 0 : index
    %c0_2 = arith.constant 0 : index
    %1 = vector.load %arg2[%c0_1, %c0_2] : memref<16x128xf32, #tpu.memory_space<vmem>>, vector<16x128xf32>
    %c0_3 = arith.constant 0 : index
    %c0_4 = arith.constant 0 : index
    %2 = vector.load %arg3[%c0_3, %c0_4] : memref<1024x64xbf16, #tpu.memory_space<vmem>>, vector<1024x64xbf16>
    %cst = arith.constant dense<0.000000e+00> : vector<16x64xf32>
    %3 = tpu.matmul %0, %2, %cst {dimension_numbers = #tpu.dot_dimension_numbers<[1], [0], [0], [1], [0, 0, 1, 1], [], []>} : vector<16x1024xbf16>, vector<1024x64xbf16>, vector<16x64xf32> -> vector<16x64xf32>
    %c0_5 = arith.constant 0 : index
    %c0_6 = arith.constant 0 : index
    %4 = vector.load %arg4[%c0_5, %c0_6] : memref<1x64xf32, #tpu.memory_space<vmem>>, vector<1x64xf32>
    %5 = vector.broadcast %4 : vector<1x64xf32> to vector<16x64xf32>
    %6 = arith.addf %3, %5 : vector<16x64xf32>
    %7 = math.tanh %6 : vector<16x64xf32>
    %8 = arith.truncf %7 : vector<16x64xf32> to vector<16x64xbf16>
    %c0_7 = arith.constant 0 : index
    %c0_8 = arith.constant 0 : index
    %9 = vector.load %arg5[%c0_7, %c0_8] : memref<64x128xbf16, #tpu.memory_space<vmem>>, vector<64x128xbf16>
    %cst_9 = arith.constant dense<0.000000e+00> : vector<16x128xf32>
    %10 = tpu.matmul %8, %9, %cst_9 {dimension_numbers = #tpu.dot_dimension_numbers<[1], [0], [0], [1], [0, 0, 1, 1], [], []>} : vector<16x64xbf16>, vector<64x128xbf16>, vector<16x128xf32> -> vector<16x128xf32>
    %c0_10 = arith.constant 0 : index
    %c0_11 = arith.constant 0 : index
    %11 = vector.load %arg6[%c0_10, %c0_11] : memref<1x128xf32, #tpu.memory_space<vmem>>, vector<1x128xf32>
    %12 = vector.broadcast %11 : vector<1x128xf32> to vector<16x128xf32>
    %13 = arith.addf %10, %12 : vector<16x128xf32>
    %c120_i32 = arith.constant 120 : i32
    %14 = tpu.dynamic_rotate %13 by %c120_i32 dim 1 : vector<16x128xf32>, i32 -> vector<16x128xf32>
    %cst_12 = arith.constant 0.000000e+00 : f32
    %15 = vector.broadcast %cst_12 : f32 to vector<16x128xf32>
    %16 = arith.maximumf %14, %15 : vector<16x128xf32>
    %17 = vector.broadcast %cst_12 : f32 to vector<16x128xf32>
    %18 = arith.subf %14, %17 : vector<16x128xf32>
    %19 = arith.cmpf one, %18, %18 : vector<16x128xf32>
    %20 = vector.broadcast %cst_12 : f32 to vector<16x128xf32>
    %21 = arith.addf %14, %20 : vector<16x128xf32>
    %22 = math.absf %18 : vector<16x128xf32>
    %cst_13 = arith.constant 0.000000e+00 : f32
    %23 = vector.broadcast %cst_13 : f32 to vector<16x128xf32>
    %24 = arith.subf %23, %22 : vector<16x128xf32>
    %25 = math.exp %24 : vector<16x128xf32>
    %26 = math.log1p %25 : vector<16x128xf32>
    %27 = arith.addf %16, %26 : vector<16x128xf32>
    %28 = arith.select %19, %21, %27 : vector<16x128xi1>, vector<16x128xf32>
    %cst_14 = arith.constant 9.99999974E-5 : f32
    %cst_15 = arith.constant 5.000000e+00 : f32
    %29 = vector.broadcast %cst_14 : f32 to vector<16x128xf32>
    %30 = arith.maximumf %29, %28 : vector<16x128xf32>
    %31 = vector.broadcast %cst_15 : f32 to vector<16x128xf32>
    %32 = arith.minimumf %31, %30 : vector<16x128xf32>
    %33 = math.sqrt %32 : vector<16x128xf32>
    %34 = arith.mulf %1, %33 : vector<16x128xf32>
    %35 = arith.addf %34, %13 : vector<16x128xf32>
    %36 = arith.truncf %35 : vector<16x128xf32> to vector<16x128xbf16>
    %c0_16 = arith.constant 0 : index
    %c0_17 = arith.constant 0 : index
    %37 = vector.load %arg7[%c0_16, %c0_17] : memref<128x64xbf16, #tpu.memory_space<vmem>>, vector<128x64xbf16>
    %cst_18 = arith.constant dense<0.000000e+00> : vector<16x64xf32>
    %38 = tpu.matmul %36, %37, %cst_18 {dimension_numbers = #tpu.dot_dimension_numbers<[1], [0], [0], [1], [0, 0, 1, 1], [], []>} : vector<16x128xbf16>, vector<128x64xbf16>, vector<16x64xf32> -> vector<16x64xf32>
    %c0_19 = arith.constant 0 : index
    %c0_20 = arith.constant 0 : index
    %39 = vector.load %arg8[%c0_19, %c0_20] : memref<1x64xf32, #tpu.memory_space<vmem>>, vector<1x64xf32>
    %40 = vector.broadcast %39 : vector<1x64xf32> to vector<16x64xf32>
    %41 = arith.addf %38, %40 : vector<16x64xf32>
    %42 = math.tanh %41 : vector<16x64xf32>
    %43 = arith.truncf %42 : vector<16x64xf32> to vector<16x64xbf16>
    %c0_21 = arith.constant 0 : index
    %c0_22 = arith.constant 0 : index
    %44 = vector.load %arg9[%c0_21, %c0_22] : memref<64x1024xbf16, #tpu.memory_space<vmem>>, vector<64x1024xbf16>
    %cst_23 = arith.constant dense<0.000000e+00> : vector<16x1024xf32>
    %45 = tpu.matmul %43, %44, %cst_23 {dimension_numbers = #tpu.dot_dimension_numbers<[1], [0], [0], [1], [0, 0, 1, 1], [], []>} : vector<16x64xbf16>, vector<64x1024xbf16>, vector<16x1024xf32> -> vector<16x1024xf32>
    %c0_24 = arith.constant 0 : index
    %c0_25 = arith.constant 0 : index
    %46 = vector.load %arg10[%c0_24, %c0_25] : memref<1x1024xf32, #tpu.memory_space<vmem>>, vector<1x1024xf32>
    %47 = vector.broadcast %46 : vector<1x1024xf32> to vector<16x1024xf32>
    %48 = arith.addf %45, %47 : vector<16x1024xf32>
    %49 = arith.negf %48 : vector<16x1024xf32>
    %50 = math.exp %49 : vector<16x1024xf32>
    %cst_26 = arith.constant 1.000000e+00 : f32
    %51 = vector.broadcast %cst_26 : f32 to vector<16x1024xf32>
    %52 = arith.addf %51, %50 : vector<16x1024xf32>
    %53 = arith.divf %51, %52 : vector<16x1024xf32>
    %54 = arith.truncf %53 : vector<16x1024xf32> to vector<16x1024xbf16>
    %c0_27 = arith.constant 0 : index
    %c0_28 = arith.constant 0 : index
    %55 = vector.load %arg11[%c0_27, %c0_28] : memref<16x1024xbf16, #tpu.memory_space<vmem>>, vector<16x1024xbf16>
    tpu.vector_store %arg11[%c0_27, %c0_28], %54 {strides = array<i32>} : memref<16x1024xbf16, #tpu.memory_space<vmem>>, vector<16x1024xbf16>,
    %56 = tpu.iota {dimensions = array<i32: 1>} : vector<16x128xi32>
    %c8_i32 = arith.constant 8 : i32
    %57 = tpu.dynamic_rotate %32 by %c8_i32 dim 1 : vector<16x128xf32>, i32 -> vector<16x128xf32>
    %c16_i32 = arith.constant 16 : i32
    %58 = tpu.dynamic_rotate %35 by %c16_i32 dim 1 : vector<16x128xf32>, i32 -> vector<16x128xf32>
    %c8_i32_29 = arith.constant 8 : i32
    %59 = vector.broadcast %c8_i32_29 : i32 to vector<16x128xi32>
    %60 = arith.cmpi slt, %56, %59 : vector<16x128xi32>
    %c16_i32_30 = arith.constant 16 : i32
    %61 = vector.broadcast %c16_i32_30 : i32 to vector<16x128xi32>
    %62 = arith.cmpi slt, %56, %61 : vector<16x128xi32>
    %c24_i32 = arith.constant 24 : i32
    %63 = vector.broadcast %c24_i32 : i32 to vector<16x128xi32>
    %64 = arith.cmpi slt, %56, %63 : vector<16x128xi32>
    %cst_31 = arith.constant 0.000000e+00 : f32
    %65 = vector.broadcast %cst_31 : f32 to vector<16x128xf32>
    %66 = arith.select %64, %58, %65 : vector<16x128xi1>, vector<16x128xf32>
    %67 = arith.select %62, %57, %66 : vector<16x128xi1>, vector<16x128xf32>
    %68 = arith.select %60, %13, %67 : vector<16x128xi1>, vector<16x128xf32>
    %c0_32 = arith.constant 0 : index
    %c0_33 = arith.constant 0 : index
    %69 = vector.load %arg12[%c0_32, %c0_33] : memref<16x128xf32, #tpu.memory_space<vmem>>, vector<16x128xf32>
    tpu.vector_store %arg12[%c0_32, %c0_33], %68 {strides = array<i32>} : memref<16x128xf32, #tpu.memory_space<vmem>>, vector<16x128xf32>,
    return
  }
  func.func @transform_0(%arg0: i32) -> (i32, i32) {
    %c0_i32 = arith.constant 0 : i32
    %c0_i32_0 = arith.constant 0 : i32
    return %arg0, %c0_i32 : i32, i32
  }
  func.func @transform_1(%arg0: i32) -> (i32, i32) {
    %c0_i32 = arith.constant 0 : i32
    %c0_i32_0 = arith.constant 0 : i32
    return %arg0, %c0_i32 : i32, i32
  }
  func.func @transform_2(%arg0: i32) -> (i32, i32) {
    %c0_i32 = arith.constant 0 : i32
    %c0_i32_0 = arith.constant 0 : i32
    %c0_i32_1 = arith.constant 0 : i32
    return %c0_i32, %c0_i32_0 : i32, i32
  }
  func.func @transform_3(%arg0: i32) -> (i32, i32) {
    %c0_i32 = arith.constant 0 : i32
    %c0_i32_0 = arith.constant 0 : i32
    %c0_i32_1 = arith.constant 0 : i32
    return %c0_i32, %c0_i32_0 : i32, i32
  }
  func.func @transform_4(%arg0: i32) -> (i32, i32) {
    %c0_i32 = arith.constant 0 : i32
    %c0_i32_0 = arith.constant 0 : i32
    %c0_i32_1 = arith.constant 0 : i32
    return %c0_i32, %c0_i32_0 : i32, i32
  }
  func.func @transform_5(%arg0: i32) -> (i32, i32) {
    %c0_i32 = arith.constant 0 : i32
    %c0_i32_0 = arith.constant 0 : i32
    %c0_i32_1 = arith.constant 0 : i32
    return %c0_i32, %c0_i32_0 : i32, i32
  }
  func.func @transform_6(%arg0: i32) -> (i32, i32) {
    %c0_i32 = arith.constant 0 : i32
    %c0_i32_0 = arith.constant 0 : i32
    %c0_i32_1 = arith.constant 0 : i32
    return %c0_i32, %c0_i32_0 : i32, i32
  }
  func.func @transform_7(%arg0: i32) -> (i32, i32) {
    %c0_i32 = arith.constant 0 : i32
    %c0_i32_0 = arith.constant 0 : i32
    %c0_i32_1 = arith.constant 0 : i32
    return %c0_i32, %c0_i32_0 : i32, i32
  }
  func.func @transform_8(%arg0: i32) -> (i32, i32) {
    %c0_i32 = arith.constant 0 : i32
    %c0_i32_0 = arith.constant 0 : i32
    %c0_i32_1 = arith.constant 0 : i32
    return %c0_i32, %c0_i32_0 : i32, i32
  }
  func.func @transform_9(%arg0: i32) -> (i32, i32) {
    %c0_i32 = arith.constant 0 : i32
    %c0_i32_0 = arith.constant 0 : i32
    %c0_i32_1 = arith.constant 0 : i32
    return %c0_i32, %c0_i32_0 : i32, i32
  }
  func.func @transform_10(%arg0: i32) -> (i32, i32) {
    %c0_i32 = arith.constant 0 : i32
    %c0_i32_0 = arith.constant 0 : i32
    return %arg0, %c0_i32 : i32, i32
  }
  func.func @transform_11(%arg0: i32) -> (i32, i32) {
    %c0_i32 = arith.constant 0 : i32
    %c0_i32_0 = arith.constant 0 : i32
    return %arg0, %c0_i32 : i32, i32
  }
}

</mosaic_0001>

<llo_original>
// kernel: tpu_custom_call.1
$region0: #{tpu_custom_call.1}
  #allocation0 [shape = 'u32[]', space=smem, size = 0x4, offset = 0x4, fixed_abs, tag = 'smem constant byte address 0x4 - core index']
  #allocation1 [shape = 'u32[72,128]{1,0:T(1,128)}', space=vmem, size = 0x9000, scoped, tag = 'internal scratch']
  %s0 = inlined_call_operand.vmem [shape: bf16[16,1024], index: 0, kind: input, shape index: {}]
  %s1 = inlined_call_operand.vmem [shape: f32[16,128], index: 1, kind: input, shape index: {}]
  %s2 = inlined_call_operand.vmem [shape: bf16[1024,64], index: 2, kind: input, shape index: {}]
  %s3 = inlined_call_operand.vmem [shape: f32[1,64], index: 3, kind: input, shape index: {}]
  %s4 = inlined_call_operand.vmem [shape: bf16[64,128], index: 4, kind: input, shape index: {}]
  %s5 = inlined_call_operand.vmem [shape: f32[1,128], index: 5, kind: input, shape index: {}]
  %s6 = inlined_call_operand.vmem [shape: bf16[128,64], index: 6, kind: input, shape index: {}]
  %s7 = inlined_call_operand.vmem [shape: f32[1,64], index: 7, kind: input, shape index: {}]
  %s8 = inlined_call_operand.vmem [shape: bf16[64,1024], index: 8, kind: input, shape index: {}]
  %s9 = inlined_call_operand.vmem [shape: f32[1,1024], index: 9, kind: input, shape index: {}]
  %s10 = inlined_call_operand.hbm [shape: bf16[16,1024], index: 10, kind: output, shape index: {0}]
  %s11 = inlined_call_operand.hbm [shape: f32[16,128], index: 11, kind: output, shape index: {1}]
  %12 = xla_tuple %s10, %s11
  %s13 = sld [smem:[#allocation0]]
  $region58: #{tpu_custom_call.1} parent=0
    _
  %s15 = ssub.s32 1, %s13
  %s16 = scalar_select 0, %s15, %s13
  $region1: #{tpu_custom_call.1} parent=0
    #allocation2 [shape = 'u8[32768]{0}', space=vmem, size = 0x8000, scoped, tag = 'output window, operand 0, single buffered']
    #allocation3 [shape = 's32[1]{0}', space=sflag, size = 0x4, scoped, tag = 'scoped memory for tpu_custom_call.1']
    #allocation4 [shape = 'u8[8192]{0}', space=vmem, size = 0x2000, scoped, tag = 'output window, operand 1, single buffered']
    #allocation5 [shape = 's32[1]{0}', space=sflag, size = 0x4, scoped, tag = 'scoped memory for tpu_custom_call.1']
    %17 = vsyncpa [#allocation3], 0
    %18 = vsyncpa [#allocation5], 0
    // Predicated region
    $region2: #{tpu_custom_call.1} parent=1 // pred_check
      _
    $region3: #{tpu_custom_call.1} parent=1 // pred_check_branch
      %20 = sbr.rel (0) target = $region5
    $region4: #{tpu_custom_call.1} parent=1 // pred_region
      _
    $region5: #{tpu_custom_call.1} parent=1 // pred_fallthru
      _
    // Predicated region
    $region6: #{tpu_custom_call.1} parent=1 // pred_check
      _
    $region7: #{tpu_custom_call.1} parent=1 // pred_check_branch
      %22 = sbr.rel (0) target = $region9
    $region8: #{tpu_custom_call.1} parent=1 // pred_region
      _
    $region9: #{tpu_custom_call.1} parent=1 // pred_fallthru
      _
    // Predicated region
    $region10: #{tpu_custom_call.1} parent=1 // pred_check
      _
    $region11: #{tpu_custom_call.1} parent=1 // pred_check_branch
      %24 = sbr.rel (0) target = $region13
    $region12: #{tpu_custom_call.1} parent=1 // pred_region
      _
    $region13: #{tpu_custom_call.1} parent=1 // pred_fallthru
      _
    // Predicated region
    $region14: #{tpu_custom_call.1} parent=1 // pred_check
      _
    $region15: #{tpu_custom_call.1} parent=1 // pred_check_branch
      %26 = sbr.rel (0) target = $region17
    $region16: #{tpu_custom_call.1} parent=1 // pred_region
      _
    $region17: #{tpu_custom_call.1} parent=1 // pred_fallthru
      _
    // Predicated region
    $region18: #{tpu_custom_call.1} parent=1 // pred_check
      _
    $region19: #{tpu_custom_call.1} parent=1 // pred_check_branch
      %28 = sbr.rel (0) target = $region21
    $region20: #{tpu_custom_call.1} parent=1 // pred_region
      _
    $region21: #{tpu_custom_call.1} parent=1 // pred_fallthru
      _
    // Predicated region
    $region22: #{tpu_custom_call.1} parent=1 // pred_check
      _
    $region23: #{tpu_custom_call.1} parent=1 // pred_check_branch
      %30 = sbr.rel (0) target = $region25
    $region24: #{tpu_custom_call.1} parent=1 // pred_region
      _
    $region25: #{tpu_custom_call.1} parent=1 // pred_fallthru
      _
    // Predicated region
    $region26: #{tpu_custom_call.1} parent=1 // pred_check
      _
    $region27: #{tpu_custom_call.1} parent=1 // pred_check_branch
      %32 = sbr.rel (0) target = $region29
    $region28: #{tpu_custom_call.1} parent=1 // pred_region
      _
    $region29: #{tpu_custom_call.1} parent=1 // pred_fallthru
      _
    // Predicated region
    $region30: #{tpu_custom_call.1} parent=1 // pred_check
      _
    $region31: #{tpu_custom_call.1} parent=1 // pred_check_branch
      %34 = sbr.rel (0) target = $region33
    $region32: #{tpu_custom_call.1} parent=1 // pred_region
      _
    $region33: #{tpu_custom_call.1} parent=1 // pred_fallthru
      _
    // Predicated region
    $region34: #{tpu_custom_call.1} parent=1 // pred_check
      _
    $region35: #{tpu_custom_call.1} parent=1 // pred_check_branch
      %36 = sbr.rel (0) target = $region37
    $region36: #{tpu_custom_call.1} parent=1 // pred_region
      _
    $region37: #{tpu_custom_call.1} parent=1 // pred_fallthru
      _
    // Predicated region
    $region38: #{tpu_custom_call.1} parent=1 // pred_check
      _
    $region39: #{tpu_custom_call.1} parent=1 // pred_check_branch
      %38 = sbr.rel (0) target = $region41
    $region40: #{tpu_custom_call.1} parent=1 // pred_region
      _
    $region41: #{tpu_custom_call.1} parent=1 // pred_fallthru
      _
    %v40 = vld [vmem:[%s0] sm:$0xff]
    %v41 = vld [vmem:[%s0 + $0x8] sm:$0xff]
    %v42 = vld [vmem:[%s0 + $0x10] sm:$0xff]
    %v43 = vld [vmem:[%s0 + $0x18] sm:$0xff]
    %v44 = vld [vmem:[%s0 + $0x20] sm:$0xff]
    %v45 = vld [vmem:[%s0 + $0x28] sm:$0xff]
    %v46 = vld [vmem:[%s0 + $0x30] sm:$0xff]
    %v47 = vld [vmem:[%s0 + $0x38] sm:$0xff]
    %v48 = vld [vmem:[%s1] sm:$0xff]
    %v49 = vld [vmem:[%s1 + $0x8] sm:$0xff]
    %v50 = vld [vmem:[%s2] sm:$0xf]
    %v51 = vld [vmem:[%s2 + $0x4] sm:$0xf]
    %v52 = vld [vmem:[%s2 + $0x8] sm:$0xf]
    %v53 = vld [vmem:[%s2 + $0xc] sm:$0xf]
    %v54 = vld [vmem:[%s2 + $0x10] sm:$0xf]
    %v55 = vld [vmem:[%s2 + $0x14] sm:$0xf]
    %v56 = vld [vmem:[%s2 + $0x18] sm:$0xf]
    %v57 = vld [vmem:[%s2 + $0x1c] sm:$0xf]
    %v58 = vld [vmem:[%s2 + $0x20] sm:$0xf]
    %v59 = vld [vmem:[%s2 + $0x24] sm:$0xf]
    %v60 = vld [vmem:[%s2 + $0x28] sm:$0xf]
    %v61 = vld [vmem:[%s2 + $0x2c] sm:$0xf]
    %v62 = vld [vmem:[%s2 + $0x30] sm:$0xf]
    %v63 = vld [vmem:[%s2 + $0x34] sm:$0xf]
    %v64 = vld [vmem:[%s2 + $0x38] sm:$0xf]
    %v65 = vld [vmem:[%s2 + $0x3c] sm:$0xf]
    %v66 = vld [vmem:[%s2 + $0x40] sm:$0xf]
    %v67 = vld [vmem:[%s2 + $0x44] sm:$0xf]
    %v68 = vld [vmem:[%s2 + $0x48] sm:$0xf]
    %v69 = vld [vmem:[%s2 + $0x4c] sm:$0xf]
    %v70 = vld [vmem:[%s2 + $0x50] sm:$0xf]
    %v71 = vld [vmem:[%s2 + $0x54] sm:$0xf]
    %v72 = vld [vmem:[%s2 + $0x58] sm:$0xf]
    %v73 = vld [vmem:[%s2 + $0x5c] sm:$0xf]
    %v74 = vld [vmem:[%s2 + $0x60] sm:$0xf]
    %v75 = vld [vmem:[%s2 + $0x64] sm:$0xf]
    %v76 = vld [vmem:[%s2 + $0x68] sm:$0xf]
    %v77 = vld [vmem:[%s2 + $0x6c] sm:$0xf]
    %v78 = vld [vmem:[%s2 + $0x70] sm:$0xf]
    %v79 = vld [vmem:[%s2 + $0x74] sm:$0xf]
    %v80 = vld [vmem:[%s2 + $0x78] sm:$0xf]
    %v81 = vld [vmem:[%s2 + $0x7c] sm:$0xf]
    %v82 = vld [vmem:[%s2 + $0x80] sm:$0xf]
    %v83 = vld [vmem:[%s2 + $0x84] sm:$0xf]
    %v84 = vld [vmem:[%s2 + $0x88] sm:$0xf]
    %v85 = vld [vmem:[%s2 + $0x8c] sm:$0xf]
    %v86 = vld [vmem:[%s2 + $0x90] sm:$0xf]
    %v87 = vld [vmem:[%s2 + $0x94] sm:$0xf]
    %v88 = vld [vmem:[%s2 + $0x98] sm:$0xf]
    %v89 = vld [vmem:[%s2 + $0x9c] sm:$0xf]
    %v90 = vld [vmem:[%s2 + $0xa0] sm:$0xf]
    %v91 = vld [vmem:[%s2 + $0xa4] sm:$0xf]
    %v92 = vld [vmem:[%s2 + $0xa8] sm:$0xf]
    %v93 = vld [vmem:[%s2 + $0xac] sm:$0xf]
    %v94 = vld [vmem:[%s2 + $0xb0] sm:$0xf]
    %v95 = vld [vmem:[%s2 + $0xb4] sm:$0xf]
    %v96 = vld [vmem:[%s2 + $0xb8] sm:$0xf]
    %v97 = vld [vmem:[%s2 + $0xbc] sm:$0xf]
    %v98 = vld [vmem:[%s2 + $0xc0] sm:$0xf]
    %v99 = vld [vmem:[%s2 + $0xc4] sm:$0xf]
    %v100 = vld [vmem:[%s2 + $0xc8] sm:$0xf]
    %v101 = vld [vmem:[%s2 + $0xcc] sm:$0xf]
    %v102 = vld [vmem:[%s2 + $0xd0] sm:$0xf]
    %v103 = vld [vmem:[%s2 + $0xd4] sm:$0xf]
    %v104 = vld [vmem:[%s2 + $0xd8] sm:$0xf]
    %v105 = vld [vmem:[%s2 + $0xdc] sm:$0xf]
    %v106 = vld [vmem:[%s2 + $0xe0] sm:$0xf]
    %v107 = vld [vmem:[%s2 + $0xe4] sm:$0xf]
    %v108 = vld [vmem:[%s2 + $0xe8] sm:$0xf]
    %v109 = vld [vmem:[%s2 + $0xec] sm:$0xf]
    %v110 = vld [vmem:[%s2 + $0xf0] sm:$0xf]
    %v111 = vld [vmem:[%s2 + $0xf4] sm:$0xf]
    %v112 = vld [vmem:[%s2 + $0xf8] sm:$0xf]
    %v113 = vld [vmem:[%s2 + $0xfc] sm:$0xf]
    %v114 = vld [vmem:[%s2 + $0x100] sm:$0xf]
    %v115 = vld [vmem:[%s2 + $0x104] sm:$0xf]
    %v116 = vld [vmem:[%s2 + $0x108] sm:$0xf]
    %v117 = vld [vmem:[%s2 + $0x10c] sm:$0xf]
    %v118 = vld [vmem:[%s2 + $0x110] sm:$0xf]
    %v119 = vld [vmem:[%s2 + $0x114] sm:$0xf]
    %v120 = vld [vmem:[%s2 + $0x118] sm:$0xf]
    %v121 = vld [vmem:[%s2 + $0x11c] sm:$0xf]
    %v122 = vld [vmem:[%s2 + $0x120] sm:$0xf]
    %v123 = vld [vmem:[%s2 + $0x124] sm:$0xf]
    %v124 = vld [vmem:[%s2 + $0x128] sm:$0xf]
    %v125 = vld [vmem:[%s2 + $0x12c] sm:$0xf]
    %v126 = vld [vmem:[%s2 + $0x130] sm:$0xf]
    %v127 = vld [vmem:[%s2 + $0x134] sm:$0xf]
    %v128 = vld [vmem:[%s2 + $0x138] sm:$0xf]
    %v129 = vld [vmem:[%s2 + $0x13c] sm:$0xf]
    %v130 = vld [vmem:[%s2 + $0x140] sm:$0xf]
    %v131 = vld [vmem:[%s2 + $0x144] sm:$0xf]
    %v132 = vld [vmem:[%s2 + $0x148] sm:$0xf]
    %v133 = vld [vmem:[%s2 + $0x14c] sm:$0xf]
    %v134 = vld [vmem:[%s2 + $0x150] sm:$0xf]
    %v135 = vld [vmem:[%s2 + $0x154] sm:$0xf]
    %v136 = vld [vmem:[%s2 + $0x158] sm:$0xf]
    %v137 = vld [vmem:[%s2 + $0x15c] sm:$0xf]
    %v138 = vld [vmem:[%s2 + $0x160] sm:$0xf]
    %v139 = vld [vmem:[%s2 + $0x164] sm:$0xf]
    %v140 = vld [vmem:[%s2 + $0x168] sm:$0xf]
    %v141 = vld [vmem:[%s2 + $0x16c] sm:$0xf]
    %v142 = vld [vmem:[%s2 + $0x170] sm:$0xf]
    %v143 = vld [vmem:[%s2 + $0x174] sm:$0xf]
    %v144 = vld [vmem:[%s2 + $0x178] sm:$0xf]
    %v145 = vld [vmem:[%s2 + $0x17c] sm:$0xf]
    %v146 = vld [vmem:[%s2 + $0x180] sm:$0xf]
    %v147 = vld [vmem:[%s2 + $0x184] sm:$0xf]
    %v148 = vld [vmem:[%s2 + $0x188] sm:$0xf]
    %v149 = vld [vmem:[%s2 + $0x18c] sm:$0xf]
    %v150 = vld [vmem:[%s2 + $0x190] sm:$0xf]
    %v151 = vld [vmem:[%s2 + $0x194] sm:$0xf]
    %v152 = vld [vmem:[%s2 + $0x198] sm:$0xf]
    %v153 = vld [vmem:[%s2 + $0x19c] sm:$0xf]
    %v154 = vld [vmem:[%s2 + $0x1a0] sm:$0xf]
    %v155 = vld [vmem:[%s2 + $0x1a4] sm:$0xf]
    %v156 = vld [vmem:[%s2 + $0x1a8] sm:$0xf]
    %v157 = vld [vmem:[%s2 + $0x1ac] sm:$0xf]
    %v158 = vld [vmem:[%s2 + $0x1b0] sm:$0xf]
    %v159 = vld [vmem:[%s2 + $0x1b4] sm:$0xf]
    %v160 = vld [vmem:[%s2 + $0x1b8] sm:$0xf]
    %v161 = vld [vmem:[%s2 + $0x1bc] sm:$0xf]
    %v162 = vld [vmem:[%s2 + $0x1c0] sm:$0xf]
    %v163 = vld [vmem:[%s2 + $0x1c4] sm:$0xf]
    %v164 = vld [vmem:[%s2 + $0x1c8] sm:$0xf]
    %v165 = vld [vmem:[%s2 + $0x1cc] sm:$0xf]
    %v166 = vld [vmem:[%s2 + $0x1d0] sm:$0xf]
    %v167 = vld [vmem:[%s2 + $0x1d4] sm:$0xf]
    %v168 = vld [vmem:[%s2 + $0x1d8] sm:$0xf]
    %v169 = vld [vmem:[%s2 + $0x1dc] sm:$0xf]
    %v170 = vld [vmem:[%s2 + $0x1e0] sm:$0xf]
    %v171 = vld [vmem:[%s2 + $0x1e4] sm:$0xf]
    %v172 = vld [vmem:[%s2 + $0x1e8] sm:$0xf]
    %v173 = vld [vmem:[%s2 + $0x1ec] sm:$0xf]
    %v174 = vld [vmem:[%s2 + $0x1f0] sm:$0xf]
    %v175 = vld [vmem:[%s2 + $0x1f4] sm:$0xf]
    %v176 = vld [vmem:[%s2 + $0x1f8] sm:$0xf]
    %v177 = vld [vmem:[%s2 + $0x1fc] sm:$0xf]
    %v178 = vld [vmem:[%s3] sm:$0x1]
    %v180 = vperm.slane %v178, 0
    %v190 = vunpack.c.l.b16 %v40
    %v191 = vunpack.c.h.b16 %v40
    %v192 = vunpack.c.l.b16 %v41
    %v193 = vunpack.c.h.b16 %v41
    %v194 = vunpack.c.l.b16 %v42
    %v195 = vunpack.c.h.b16 %v42
    %v196 = vunpack.c.l.b16 %v43
    %v197 = vunpack.c.h.b16 %v43
    %v198 = vunpack.c.l.b16 %v44
    %v199 = vunpack.c.h.b16 %v44
    %v200 = vunpack.c.l.b16 %v45
    %v201 = vunpack.c.h.b16 %v45
    %v202 = vunpack.c.l.b16 %v46
    %v203 = vunpack.c.h.b16 %v46
    %v204 = vunpack.c.l.b16 %v47
    %v205 = vunpack.c.h.b16 %v47
    %v206 = vpack.c.b16 %v198, %v190
    %v207 = vpack.c.b16 %v199, %v191
    %v208 = vpack.c.b16 %v200, %v192
    %v209 = vpack.c.b16 %v201, %v193
    %v210 = vpack.c.b16 %v202, %v194
    %v211 = vpack.c.b16 %v203, %v195
    %v212 = vpack.c.b16 %v204, %v196
    %v213 = vpack.c.b16 %v205, %v197
    %v350 = vunpack.c.l.b16 %v50
    %v351 = vunpack.c.l.b16 %v51
    %v352 = vunpack.c.l.b16 %v52
    %v353 = vunpack.c.l.b16 %v53
    %v354 = vunpack.c.l.b16 %v54
    %v355 = vunpack.c.l.b16 %v55
    %v356 = vunpack.c.l.b16 %v56
    %v357 = vunpack.c.l.b16 %v57
    %v358 = vunpack.c.l.b16 %v58
    %v359 = vunpack.c.l.b16 %v59
    %v360 = vunpack.c.l.b16 %v60
    %v361 = vunpack.c.l.b16 %v61
    %v362 = vunpack.c.l.b16 %v62
    %v363 = vunpack.c.l.b16 %v63
    %v364 = vunpack.c.l.b16 %v64
    %v365 = vunpack.c.l.b16 %v65
    %v366 = vunpack.c.l.b16 %v66
    %v367 = vunpack.c.l.b16 %v67
    %v368 = vunpack.c.l.b16 %v68
    %v369 = vunpack.c.l.b16 %v69
    %v370 = vunpack.c.l.b16 %v70
    %v371 = vunpack.c.l.b16 %v71
    %v372 = vunpack.c.l.b16 %v72
    %v373 = vunpack.c.l.b16 %v73
    %v374 = vunpack.c.l.b16 %v74
    %v375 = vunpack.c.l.b16 %v75
    %v376 = vunpack.c.l.b16 %v76
    %v377 = vunpack.c.l.b16 %v77
    %v378 = vunpack.c.l.b16 %v78
    %v379 = vunpack.c.l.b16 %v79
    %v380 = vunpack.c.l.b16 %v80
    %v381 = vunpack.c.l.b16 %v81
    %v382 = vunpack.c.l.b16 %v82
    %v383 = vunpack.c.l.b16 %v83
    %v384 = vunpack.c.l.b16 %v84
    %v385 = vunpack.c.l.b16 %v85
    %v386 = vunpack.c.l.b16 %v86
    %v387 = vunpack.c.l.b16 %v87
    %v388 = vunpack.c.l.b16 %v88
    %v389 = vunpack.c.l.b16 %v89
    %v390 = vunpack.c.l.b16 %v90
    %v391 = vunpack.c.l.b16 %v91
    %v392 = vunpack.c.l.b16 %v92
    %v393 = vunpack.c.l.b16 %v93
    %v394 = vunpack.c.l.b16 %v94
    %v395 = vunpack.c.l.b16 %v95
    %v396 = vunpack.c.l.b16 %v96
    %v397 = vunpack.c.l.b16 %v97
    %v398 = vunpack.c.l.b16 %v98
    %v399 = vunpack.c.l.b16 %v99
    %v400 = vunpack.c.l.b16 %v100
    %v401 = vunpack.c.l.b16 %v101
    %v402 = vunpack.c.l.b16 %v102
    %v403 = vunpack.c.l.b16 %v103
    %v404 = vunpack.c.l.b16 %v104
    %v405 = vunpack.c.l.b16 %v105
    %v406 = vunpack.c.l.b16 %v106
    %v407 = vunpack.c.l.b16 %v107
    %v408 = vunpack.c.l.b16 %v108
    %v409 = vunpack.c.l.b16 %v109
    %v410 = vunpack.c.l.b16 %v110
    %v411 = vunpack.c.l.b16 %v111
    %v412 = vunpack.c.l.b16 %v112
    %v413 = vunpack.c.l.b16 %v113
    %v414 = vunpack.c.l.b16 %v114
    %v415 = vunpack.c.l.b16 %v115
    %v416 = vunpack.c.l.b16 %v116
    %v417 = vunpack.c.l.b16 %v117
    %v418 = vunpack.c.l.b16 %v118
    %v419 = vunpack.c.l.b16 %v119
    %v420 = vunpack.c.l.b16 %v120
    %v421 = vunpack.c.l.b16 %v121
    %v422 = vunpack.c.l.b16 %v122
    %v423 = vunpack.c.l.b16 %v123
    %v424 = vunpack.c.l.b16 %v124
    %v425 = vunpack.c.l.b16 %v125
    %v426 = vunpack.c.l.b16 %v126
    %v427 = vunpack.c.l.b16 %v127
    %v428 = vunpack.c.l.b16 %v128
    %v429 = vunpack.c.l.b16 %v129
    %v430 = vunpack.c.l.b16 %v130
    %v431 = vunpack.c.l.b16 %v131
    %v432 = vunpack.c.l.b16 %v132
    %v433 = vunpack.c.l.b16 %v133
    %v434 = vunpack.c.l.b16 %v134
    %v435 = vunpack.c.l.b16 %v135
    %v436 = vunpack.c.l.b16 %v136
    %v437 = vunpack.c.l.b16 %v137
    %v438 = vunpack.c.l.b16 %v138
    %v439 = vunpack.c.l.b16 %v139
    %v440 = vunpack.c.l.b16 %v140
    %v441 = vunpack.c.l.b16 %v141
    %v442 = vunpack.c.l.b16 %v142
    %v443 = vunpack.c.l.b16 %v143
    %v444 = vunpack.c.l.b16 %v144
    %v445 = vunpack.c.l.b16 %v145
    %v446 = vunpack.c.l.b16 %v146
    %v447 = vunpack.c.l.b16 %v147
    %v448 = vunpack.c.l.b16 %v148
    %v449 = vunpack.c.l.b16 %v149
    %v450 = vunpack.c.l.b16 %v150
    %v451 = vunpack.c.l.b16 %v151
    %v452 = vunpack.c.l.b16 %v152
    %v453 = vunpack.c.l.b16 %v153
    %v454 = vunpack.c.l.b16 %v154
    %v455 = vunpack.c.l.b16 %v155
    %v456 = vunpack.c.l.b16 %v156
    %v457 = vunpack.c.l.b16 %v157
    %v458 = vunpack.c.l.b16 %v158
    %v459 = vunpack.c.l.b16 %v159
    %v460 = vunpack.c.l.b16 %v160
    %v461 = vunpack.c.l.b16 %v161
    %v462 = vunpack.c.l.b16 %v162
    %v463 = vunpack.c.l.b16 %v163
    %v464 = vunpack.c.l.b16 %v164
    %v465 = vunpack.c.l.b16 %v165
    %v466 = vunpack.c.l.b16 %v166
    %v467 = vunpack.c.l.b16 %v167
    %v468 = vunpack.c.l.b16 %v168
    %v469 = vunpack.c.l.b16 %v169
    %v470 = vunpack.c.l.b16 %v170
    %v471 = vunpack.c.l.b16 %v171
    %v472 = vunpack.c.l.b16 %v172
    %v473 = vunpack.c.l.b16 %v173
    %v474 = vunpack.c.l.b16 %v174
    %v475 = vunpack.c.l.b16 %v175
    %v476 = vunpack.c.l.b16 %v176
    %v477 = vunpack.c.l.b16 %v177
    %v478 = vpack.c.b16 %v351, %v350
    %v479 = vpack.c.b16 %v353, %v352
    %v480 = vpack.c.b16 %v355, %v354
    %v481 = vpack.c.b16 %v357, %v356
    %v482 = vpack.c.b16 %v359, %v358
    %v483 = vpack.c.b16 %v361, %v360
    %v484 = vpack.c.b16 %v363, %v362
    %v485 = vpack.c.b16 %v365, %v364
    %v486 = vpack.c.b16 %v367, %v366
    %v487 = vpack.c.b16 %v369, %v368
    %v488 = vpack.c.b16 %v371, %v370
    %v489 = vpack.c.b16 %v373, %v372
    %v490 = vpack.c.b16 %v375, %v374
    %v491 = vpack.c.b16 %v377, %v376
    %v492 = vpack.c.b16 %v379, %v378
    %v493 = vpack.c.b16 %v381, %v380
    %v494 = vpack.c.b16 %v383, %v382
    %v495 = vpack.c.b16 %v385, %v384
    %v496 = vpack.c.b16 %v387, %v386
    %v497 = vpack.c.b16 %v389, %v388
    %v498 = vpack.c.b16 %v391, %v390
    %v499 = vpack.c.b16 %v393, %v392
    %v500 = vpack.c.b16 %v395, %v394
    %v501 = vpack.c.b16 %v397, %v396
    %v502 = vpack.c.b16 %v399, %v398
    %v503 = vpack.c.b16 %v401, %v400
    %v504 = vpack.c.b16 %v403, %v402
    %v505 = vpack.c.b16 %v405, %v404
    %v506 = vpack.c.b16 %v407, %v406
    %v507 = vpack.c.b16 %v409, %v408
    %v508 = vpack.c.b16 %v411, %v410
    %v509 = vpack.c.b16 %v413, %v412
    %v510 = vpack.c.b16 %v415, %v414
    %v511 = vpack.c.b16 %v417, %v416
    %v512 = vpack.c.b16 %v419, %v418
    %v513 = vpack.c.b16 %v421, %v420
    %v514 = vpack.c.b16 %v423, %v422
    %v515 = vpack.c.b16 %v425, %v424
    %v516 = vpack.c.b16 %v427, %v426
    %v517 = vpack.c.b16 %v429, %v428
    %v518 = vpack.c.b16 %v431, %v430
    %v519 = vpack.c.b16 %v433, %v432
    %v520 = vpack.c.b16 %v435, %v434
    %v521 = vpack.c.b16 %v437, %v436
    %v522 = vpack.c.b16 %v439, %v438
    %v523 = vpack.c.b16 %v441, %v440
    %v524 = vpack.c.b16 %v443, %v442
    %v525 = vpack.c.b16 %v445, %v444
    %v526 = vpack.c.b16 %v447, %v446
    %v527 = vpack.c.b16 %v449, %v448
    %v528 = vpack.c.b16 %v451, %v450
    %v529 = vpack.c.b16 %v453, %v452
    %v530 = vpack.c.b16 %v455, %v454
    %v531 = vpack.c.b16 %v457, %v456
    %v532 = vpack.c.b16 %v459, %v458
    %v533 = vpack.c.b16 %v461, %v460
    %v534 = vpack.c.b16 %v463, %v462
    %v535 = vpack.c.b16 %v465, %v464
    %v536 = vpack.c.b16 %v467, %v466
    %v537 = vpack.c.b16 %v469, %v468
    %v538 = vpack.c.b16 %v471, %v470
    %v539 = vpack.c.b16 %v473, %v472
    %v540 = vpack.c.b16 %v475, %v474
    %v541 = vpack.c.b16 %v477, %v476
    %606 = vmatpush.bf16.msra.mxu0 %v485
    %607 = vmatpush.bf16.msra.mxu0 %v484
    %608 = vmatpush.bf16.msra.mxu0 %v483
    %609 = vmatpush.bf16.msra.mxu0 %v482
    %610 = vmatpush.bf16.msra.mxu0 %v481
    %611 = vmatpush.bf16.msra.mxu0 %v480
    %612 = vmatpush.bf16.msra.mxu0 %v479
    %613 = vmatpush.bf16.msra.mxu0 %v478
    %614 = vmatmul.bf16.gmra.mxu0 %v206
    %v615 = vpop.f32.mrf.mxu0
    %v616 = vadd.f32 %v180, %v615
    %v617 = vpop.f32.mrf.mxu0
    %v618 = vadd.f32 %v180, %v617
    %619 = vdwg.mxu0
    %620 = vmatpush.bf16.msra.mxu0 %v493
    %621 = vmatpush.bf16.msra.mxu0 %v492
    %622 = vmatpush.bf16.msra.mxu0 %v491
    %623 = vmatpush.bf16.msra.mxu0 %v490
    %624 = vmatpush.bf16.msra.mxu0 %v489
    %625 = vmatpush.bf16.msra.mxu0 %v488
    %626 = vmatpush.bf16.msra.mxu0 %v487
    %627 = vmatpush.bf16.msra.mxu0 %v486
    %628 = vmatmul.bf16.gmra.mxu0 %v207
    %v629 = vpop.f32.mrf.mxu0
    %v630 = vadd.f32 %v616, %v629
    %v631 = vpop.f32.mrf.mxu0
    %v632 = vadd.f32 %v618, %v631
    %633 = vdwg.mxu0
    %634 = vmatpush.bf16.msra.mxu0 %v501
    %635 = vmatpush.bf16.msra.mxu0 %v500
    %636 = vmatpush.bf16.msra.mxu0 %v499
    %637 = vmatpush.bf16.msra.mxu0 %v498
    %638 = vmatpush.bf16.msra.mxu0 %v497
    %639 = vmatpush.bf16.msra.mxu0 %v496
    %640 = vmatpush.bf16.msra.mxu0 %v495
    %641 = vmatpush.bf16.msra.mxu0 %v494
    %642 = vmatmul.bf16.gmra.mxu0 %v208
    %v643 = vpop.f32.mrf.mxu0
    %v644 = vadd.f32 %v630, %v643
    %v645 = vpop.f32.mrf.mxu0
    %v646 = vadd.f32 %v632, %v645
    %647 = vdwg.mxu0
    %648 = vmatpush.bf16.msra.mxu0 %v509
    %649 = vmatpush.bf16.msra.mxu0 %v508
    %650 = vmatpush.bf16.msra.mxu0 %v507
    %651 = vmatpush.bf16.msra.mxu0 %v506
    %652 = vmatpush.bf16.msra.mxu0 %v505
    %653 = vmatpush.bf16.msra.mxu0 %v504
    %654 = vmatpush.bf16.msra.mxu0 %v503
    %655 = vmatpush.bf16.msra.mxu0 %v502
    %656 = vmatmul.bf16.gmra.mxu0 %v209
    %v657 = vpop.f32.mrf.mxu0
    %v658 = vadd.f32 %v644, %v657
    %v659 = vpop.f32.mrf.mxu0
    %v660 = vadd.f32 %v646, %v659
    %661 = vdwg.mxu0
    %662 = vmatpush.bf16.msra.mxu0 %v517
    %663 = vmatpush.bf16.msra.mxu0 %v516
    %664 = vmatpush.bf16.msra.mxu0 %v515
    %665 = vmatpush.bf16.msra.mxu0 %v514
    %666 = vmatpush.bf16.msra.mxu0 %v513
    %667 = vmatpush.bf16.msra.mxu0 %v512
    %668 = vmatpush.bf16.msra.mxu0 %v511
    %669 = vmatpush.bf16.msra.mxu0 %v510
    %670 = vmatmul.bf16.gmra.mxu0 %v210
    %v671 = vpop.f32.mrf.mxu0
    %v672 = vadd.f32 %v658, %v671
    %v673 = vpop.f32.mrf.mxu0
    %v674 = vadd.f32 %v660, %v673
    %675 = vdwg.mxu0
    %676 = vmatpush.bf16.msra.mxu0 %v525
    %677 = vmatpush.bf16.msra.mxu0 %v524
    %678 = vmatpush.bf16.msra.mxu0 %v523
    %679 = vmatpush.bf16.msra.mxu0 %v522
    %680 = vmatpush.bf16.msra.mxu0 %v521
    %681 = vmatpush.bf16.msra.mxu0 %v520
    %682 = vmatpush.bf16.msra.mxu0 %v519
    %683 = vmatpush.bf16.msra.mxu0 %v518
    %684 = vmatmul.bf16.gmra.mxu0 %v211
    %v685 = vpop.f32.mrf.mxu0
    %v686 = vadd.f32 %v672, %v685
    %v687 = vpop.f32.mrf.mxu0
    %v688 = vadd.f32 %v674, %v687
    %689 = vdwg.mxu0
    %690 = vmatpush.bf16.msra.mxu0 %v533
    %691 = vmatpush.bf16.msra.mxu0 %v532
    %692 = vmatpush.bf16.msra.mxu0 %v531
    %693 = vmatpush.bf16.msra.mxu0 %v530
    %694 = vmatpush.bf16.msra.mxu0 %v529
    %695 = vmatpush.bf16.msra.mxu0 %v528
    %696 = vmatpush.bf16.msra.mxu0 %v527
    %697 = vmatpush.bf16.msra.mxu0 %v526
    %698 = vmatmul.bf16.gmra.mxu0 %v212
    %v699 = vpop.f32.mrf.mxu0
    %v700 = vadd.f32 %v686, %v699
    %v701 = vpop.f32.mrf.mxu0
    %v702 = vadd.f32 %v688, %v701
    %703 = vdwg.mxu0
    %704 = vmatpush.bf16.msra.mxu0 %v541
    %705 = vmatpush.bf16.msra.mxu0 %v540
    %706 = vmatpush.bf16.msra.mxu0 %v539
    %707 = vmatpush.bf16.msra.mxu0 %v538
    %708 = vmatpush.bf16.msra.mxu0 %v537
    %709 = vmatpush.bf16.msra.mxu0 %v536
    %710 = vmatpush.bf16.msra.mxu0 %v535
    %711 = vmatpush.bf16.msra.mxu0 %v534
    %712 = vmatmul.bf16.gmra.mxu0 %v213
    %v713 = vpop.f32.mrf.mxu0
    %v714 = vadd.f32 %v700, %v713
    %v715 = vpop.f32.mrf.mxu0
    %v716 = vadd.f32 %v702, %v715
    %717 = vdwg.mxu0
    %v718 = vtanh.pop %v714
    %v719 = vtanh.pop %v716
    %v720 = vpack.c.bf16 %v719, %v718
    %v721 = vld [vmem:[%s4] sm:$0xf]
    %v722 = vld [vmem:[%s4 + $0x4] sm:$0xf]
    %v723 = vld [vmem:[%s4 + $0x8] sm:$0xf]
    %v724 = vld [vmem:[%s4 + $0xc] sm:$0xf]
    %v725 = vld [vmem:[%s4 + $0x10] sm:$0xf]
    %v726 = vld [vmem:[%s4 + $0x14] sm:$0xf]
    %v727 = vld [vmem:[%s4 + $0x18] sm:$0xf]
    %v728 = vld [vmem:[%s4 + $0x1c] sm:$0xf]
    %v729 = vld [vmem:[%s5] sm:$0x1]
    %v731 = vperm.slane %v729, 0
    %v741 = vunpack.c.l.b16 %v721
    %v742 = vunpack.c.l.b16 %v722
    %v743 = vunpack.c.l.b16 %v723
    %v744 = vunpack.c.l.b16 %v724
    %v745 = vunpack.c.l.b16 %v725
    %v746 = vunpack.c.l.b16 %v726
    %v747 = vunpack.c.l.b16 %v727
    %v748 = vunpack.c.l.b16 %v728
    %v749 = vpack.c.b16 %v742, %v741
    %v750 = vpack.c.b16 %v744, %v743
    %v751 = vpack.c.b16 %v746, %v745
    %v752 = vpack.c.b16 %v748, %v747
    %vm757 = vcmask 523264
    %v759 = vsel %vm757, %v720, 0
    %761 = vmatpush.bf16.msra.mxu0 0
    %762 = vmatpush.bf16.msra.mxu0 0
    %763 = vmatpush.bf16.msra.mxu0 0
    %764 = vmatpush.bf16.msra.mxu0 0
    %765 = vmatpush.bf16.msra.mxu0 %v752
    %766 = vmatpush.bf16.msra.mxu0 %v751
    %767 = vmatpush.bf16.msra.mxu0 %v750
    %768 = vmatpush.bf16.msra.mxu0 %v749
    %769 = vmatmul.bf16.gmra.mxu0 %v759
    %v770 = vpop.f32.mrf.mxu0
    %v771 = vadd.f32 %v731, %v770
    %v772 = vpop.f32.mrf.mxu0
    %v773 = vadd.f32 %v731, %v772
    %774 = vdwg.mxu0
    %775 = vrot.lane.b32.xlu0 %v771, 120
    %v776 = vpop.permute.xlu0 %775
    %777 = vrot.lane.b32.xlu0 %v773, 120
    %v778 = vpop.permute.xlu0 %777
    %v779 = vmax.f32 %v776, 0.0
    %v780 = vmax.f32 %v778, 0.0
    %vm781 = vcmp.ne.f32.partialorder %v776, %v776
    %vm782 = vcmp.ne.f32.partialorder %v778, %v778
    %v783 = vadd.f32 %v776, 0.0
    %v784 = vadd.f32 %v778, 0.0
    %v785 = vand.u32 2147483647, %v776
    %v786 = vand.u32 2147483647, %v778
    %v787 = vsub.f32 0.0, %v785
    %v788 = vsub.f32 0.0, %v786
    %v789 = vmul.f32 %v787, 1.442695
    %v790 = vpow.pop %v789
    %v791 = vmul.f32 %v788, 1.442695
    %v792 = vpow.pop %v791
    %v793 = vadd.f32 %v790, 1.0
    %v794 = vlog2.pop %v793
    %v795 = vmul.f32 %v794, 0.6931472
    %v796 = vmul.f32 -0.5, %v790
    %v797 = vadd.f32 %v796, 1.0
    %v798 = vmul.f32 %v797, %v790
    %v799 = vand.u32 2147483647, %v790
    %vm800 = vcmp.lt.f32.partialorder %v799, 0.0004427343
    %v801 = vsel %vm800, %v798, %v795
    %v802 = vadd.f32 %v792, 1.0
    %v803 = vlog2.pop %v802
    %v804 = vmul.f32 %v803, 0.6931472
    %v805 = vmul.f32 -0.5, %v792
    %v806 = vadd.f32 %v805, 1.0
    %v807 = vmul.f32 %v806, %v792
    %v808 = vand.u32 2147483647, %v792
    %vm809 = vcmp.lt.f32.partialorder %v808, 0.0004427343
    %v810 = vsel %vm809, %v807, %v804
    %v811 = vadd.f32 %v779, %v801
    %v812 = vadd.f32 %v780, %v810
    %v813 = vsel %vm781, %v783, %v811
    %v814 = vsel %vm782, %v784, %v812
    %v815 = vmax.f32 %v813, 0.0001
    %v816 = vmax.f32 %v814, 0.0001
    %v817 = vmin.f32 %v815, 5.0
    %v818 = vmin.f32 %v816, 5.0
    %v819 = vrsqrt.pop %v817
    %v820 = vmul.f32 %v819, %v817
    %v821 = vmul.f32 %v820, %v819
    %v822 = vmul.f32 0.5, %v821
    %v823 = vsub.f32 1.5, %v822
    %v824 = vmul.f32 %v819, %v823
    %v825 = vmul.f32 %v817, %v824
    %vm826 = vcmp.eq.f32.partialorder %v817, inf
    %v827 = vsel %vm826, %v817, %v825
    %vm828 = vcmp.eq.f32.partialorder %v817, 0.0
    %v829 = vand.u32 %v817, 2147483648
    %v830 = vsel %vm828, %v829, %v827
    %v831 = vrsqrt.pop %v818
    %v832 = vmul.f32 %v831, %v818
    %v833 = vmul.f32 %v832, %v831
    %v834 = vmul.f32 0.5, %v833
    %v835 = vsub.f32 1.5, %v834
    %v836 = vmul.f32 %v831, %v835
    %v837 = vmul.f32 %v818, %v836
    %vm838 = vcmp.eq.f32.partialorder %v818, inf
    %v839 = vsel %vm838, %v818, %v837
    %vm840 = vcmp.eq.f32.partialorder %v818, 0.0
    %v841 = vand.u32 %v818, 2147483648
    %v842 = vsel %vm840, %v841, %v839
    %v843 = vmul.f32 %v48, %v830
    %v844 = vmul.f32 %v49, %v842
    %v845 = vadd.f32 %v843, %v771
    %v846 = vadd.f32 %v844, %v773
    %v847 = vpack.c.bf16 %v846, %v845
    %v848 = vld [vmem:[%s6] sm:$0xf]
    %v849 = vld [vmem:[%s6 + $0x4] sm:$0xf]
    %v850 = vld [vmem:[%s6 + $0x8] sm:$0xf]
    %v851 = vld [vmem:[%s6 + $0xc] sm:$0xf]
    %v852 = vld [vmem:[%s6 + $0x10] sm:$0xf]
    %v853 = vld [vmem:[%s6 + $0x14] sm:$0xf]
    %v854 = vld [vmem:[%s6 + $0x18] sm:$0xf]
    %v855 = vld [vmem:[%s6 + $0x1c] sm:$0xf]
    %v856 = vld [vmem:[%s6 + $0x20] sm:$0xf]
    %v857 = vld [vmem:[%s6 + $0x24] sm:$0xf]
    %v858 = vld [vmem:[%s6 + $0x28] sm:$0xf]
    %v859 = vld [vmem:[%s6 + $0x2c] sm:$0xf]
    %v860 = vld [vmem:[%s6 + $0x30] sm:$0xf]
    %v861 = vld [vmem:[%s6 + $0x34] sm:$0xf]
    %v862 = vld [vmem:[%s6 + $0x38] sm:$0xf]
    %v863 = vld [vmem:[%s6 + $0x3c] sm:$0xf]
    %v864 = vld [vmem:[%s7] sm:$0x1]
    %v866 = vperm.slane %v864, 0
    %v884 = vunpack.c.l.b16 %v848
    %v885 = vunpack.c.l.b16 %v849
    %v886 = vunpack.c.l.b16 %v850
    %v887 = vunpack.c.l.b16 %v851
    %v888 = vunpack.c.l.b16 %v852
    %v889 = vunpack.c.l.b16 %v853
    %v890 = vunpack.c.l.b16 %v854
    %v891 = vunpack.c.l.b16 %v855
    %v892 = vunpack.c.l.b16 %v856
    %v893 = vunpack.c.l.b16 %v857
    %v894 = vunpack.c.l.b16 %v858
    %v895 = vunpack.c.l.b16 %v859
    %v896 = vunpack.c.l.b16 %v860
    %v897 = vunpack.c.l.b16 %v861
    %v898 = vunpack.c.l.b16 %v862
    %v899 = vunpack.c.l.b16 %v863
    %v900 = vpack.c.b16 %v885, %v884
    %v901 = vpack.c.b16 %v887, %v886
    %v902 = vpack.c.b16 %v889, %v888
    %v903 = vpack.c.b16 %v891, %v890
    %v904 = vpack.c.b16 %v893, %v892
    %v905 = vpack.c.b16 %v895, %v894
    %v906 = vpack.c.b16 %v897, %v896
    %v907 = vpack.c.b16 %v899, %v898
    %916 = vmatpush.bf16.msra.mxu0 %v907
    %917 = vmatpush.bf16.msra.mxu0 %v906
    %918 = vmatpush.bf16.msra.mxu0 %v905
    %919 = vmatpush.bf16.msra.mxu0 %v904
    %920 = vmatpush.bf16.msra.mxu0 %v903
    %921 = vmatpush.bf16.msra.mxu0 %v902
    %922 = vmatpush.bf16.msra.mxu0 %v901
    %923 = vmatpush.bf16.msra.mxu0 %v900
    %924 = vmatmul.bf16.gmra.mxu0 %v847
    %v925 = vpop.f32.mrf.mxu0
    %v926 = vadd.f32 %v866, %v925
    %v927 = vpop.f32.mrf.mxu0
    %v928 = vadd.f32 %v866, %v927
    %929 = vdwg.mxu0
    %v930 = vtanh.pop %v926
    %v931 = vtanh.pop %v928
    %v932 = vpack.c.bf16 %v931, %v930
    %v933 = vld [vmem:[%s8] sm:$0xff]
    %v934 = vld [vmem:[%s8 + $0x8] sm:$0xff]
    %v935 = vld [vmem:[%s8 + $0x10] sm:$0xff]
    %v936 = vld [vmem:[%s8 + $0x18] sm:$0xff]
    %v937 = vld [vmem:[%s8 + $0x20] sm:$0xff]
    %v938 = vld [vmem:[%s8 + $0x28] sm:$0xff]
    %v939 = vld [vmem:[%s8 + $0x30] sm:$0xff]
    %v940 = vld [vmem:[%s8 + $0x38] sm:$0xff]
    %v941 = vld [vmem:[%s8 + $0x40] sm:$0xff]
    %v942 = vld [vmem:[%s8 + $0x48] sm:$0xff]
    %v943 = vld [vmem:[%s8 + $0x50] sm:$0xff]
    %v944 = vld [vmem:[%s8 + $0x58] sm:$0xff]
    %v945 = vld [vmem:[%s8 + $0x60] sm:$0xff]
    %v946 = vld [vmem:[%s8 + $0x68] sm:$0xff]
    %v947 = vld [vmem:[%s8 + $0x70] sm:$0xff]
    %v948 = vld [vmem:[%s8 + $0x78] sm:$0xff]
    %v949 = vld [vmem:[%s8 + $0x80] sm:$0xff]
    %v950 = vld [vmem:[%s8 + $0x88] sm:$0xff]
    %v951 = vld [vmem:[%s8 + $0x90] sm:$0xff]
    %v952 = vld [vmem:[%s8 + $0x98] sm:$0xff]
    %v953 = vld [vmem:[%s8 + $0xa0] sm:$0xff]
    %v954 = vld [vmem:[%s8 + $0xa8] sm:$0xff]
    %v955 = vld [vmem:[%s8 + $0xb0] sm:$0xff]
    %v956 = vld [vmem:[%s8 + $0xb8] sm:$0xff]
    %v957 = vld [vmem:[%s8 + $0xc0] sm:$0xff]
    %v958 = vld [vmem:[%s8 + $0xc8] sm:$0xff]
    %v959 = vld [vmem:[%s8 + $0xd0] sm:$0xff]
    %v960 = vld [vmem:[%s8 + $0xd8] sm:$0xff]
    %v961 = vld [vmem:[%s8 + $0xe0] sm:$0xff]
    %v962 = vld [vmem:[%s8 + $0xe8] sm:$0xff]
    %v963 = vld [vmem:[%s8 + $0xf0] sm:$0xff]
    %v964 = vld [vmem:[%s8 + $0xf8] sm:$0xff]
    %v965 = vld [vmem:[%s9] sm:$0xff]
    %v967 = vperm.slane %v965, 0
    %v968 = vperm.slane %v965, 1
    %v969 = vperm.slane %v965, 2
    %v970 = vperm.slane %v965, 3
    %v971 = vperm.slane %v965, 4
    %v972 = vperm.slane %v965, 5
    %v973 = vperm.slane %v965, 6
    %v974 = vperm.slane %v965, 7
    %v1015 = vunpack.c.l.b16 %v933
    %v1016 = vunpack.c.h.b16 %v933
    %v1017 = vunpack.c.l.b16 %v934
    %v1018 = vunpack.c.h.b16 %v934
    %v1019 = vunpack.c.l.b16 %v935
    %v1020 = vunpack.c.h.b16 %v935
    %v1021 = vunpack.c.l.b16 %v936
    %v1022 = vunpack.c.h.b16 %v936
    %v1023 = vunpack.c.l.b16 %v937
    %v1024 = vunpack.c.h.b16 %v937
    %v1025 = vunpack.c.l.b16 %v938
    %v1026 = vunpack.c.h.b16 %v938
    %v1027 = vunpack.c.l.b16 %v939
    %v1028 = vunpack.c.h.b16 %v939
    %v1029 = vunpack.c.l.b16 %v940
    %v1030 = vunpack.c.h.b16 %v940
    %v1031 = vunpack.c.l.b16 %v941
    %v1032 = vunpack.c.h.b16 %v941
    %v1033 = vunpack.c.l.b16 %v942
    %v1034 = vunpack.c.h.b16 %v942
    %v1035 = vunpack.c.l.b16 %v943
    %v1036 = vunpack.c.h.b16 %v943
    %v1037 = vunpack.c.l.b16 %v944
    %v1038 = vunpack.c.h.b16 %v944
    %v1039 = vunpack.c.l.b16 %v945
    %v1040 = vunpack.c.h.b16 %v945
    %v1041 = vunpack.c.l.b16 %v946
    %v1042 = vunpack.c.h.b16 %v946
    %v1043 = vunpack.c.l.b16 %v947
    %v1044 = vunpack.c.h.b16 %v947
    %v1045 = vunpack.c.l.b16 %v948
    %v1046 = vunpack.c.h.b16 %v948
    %v1047 = vunpack.c.l.b16 %v949
    %v1048 = vunpack.c.h.b16 %v949
    %v1049 = vunpack.c.l.b16 %v950
    %v1050 = vunpack.c.h.b16 %v950
    %v1051 = vunpack.c.l.b16 %v951
    %v1052 = vunpack.c.h.b16 %v951
    %v1053 = vunpack.c.l.b16 %v952
    %v1054 = vunpack.c.h.b16 %v952
    %v1055 = vunpack.c.l.b16 %v953
    %v1056 = vunpack.c.h.b16 %v953
    %v1057 = vunpack.c.l.b16 %v954
    %v1058 = vunpack.c.h.b16 %v954
    %v1059 = vunpack.c.l.b16 %v955
    %v1060 = vunpack.c.h.b16 %v955
    %v1061 = vunpack.c.l.b16 %v956
    %v1062 = vunpack.c.h.b16 %v956
    %v1063 = vunpack.c.l.b16 %v957
    %v1064 = vunpack.c.h.b16 %v957
    %v1065 = vunpack.c.l.b16 %v958
    %v1066 = vunpack.c.h.b16 %v958
    %v1067 = vunpack.c.l.b16 %v959
    %v1068 = vunpack.c.h.b16 %v959
    %v1069 = vunpack.c.l.b16 %v960
    %v1070 = vunpack.c.h.b16 %v960
    %v1071 = vunpack.c.l.b16 %v961
    %v1072 = vunpack.c.h.b16 %v961
    %v1073 = vunpack.c.l.b16 %v962
    %v1074 = vunpack.c.h.b16 %v962
    %v1075 = vunpack.c.l.b16 %v963
    %v1076 = vunpack.c.h.b16 %v963
    %v1077 = vunpack.c.l.b16 %v964
    %v1078 = vunpack.c.h.b16 %v964
    %v1079 = vpack.c.b16 %v1023, %v1015
    %v1080 = vpack.c.b16 %v1024, %v1016
    %v1081 = vpack.c.b16 %v1025, %v1017
    %v1082 = vpack.c.b16 %v1026, %v1018
    %v1083 = vpack.c.b16 %v1027, %v1019
    %v1084 = vpack.c.b16 %v1028, %v1020
    %v1085 = vpack.c.b16 %v1029, %v1021
    %v1086 = vpack.c.b16 %v1030, %v1022
    %v1087 = vpack.c.b16 %v1039, %v1031
    %v1088 = vpack.c.b16 %v1040, %v1032
    %v1089 = vpack.c.b16 %v1041, %v1033
    %v1090 = vpack.c.b16 %v1042, %v1034
    %v1091 = vpack.c.b16 %v1043, %v1035
    %v1092 = vpack.c.b16 %v1044, %v1036
    %v1093 = vpack.c.b16 %v1045, %v1037
    %v1094 = vpack.c.b16 %v1046, %v1038
    %v1095 = vpack.c.b16 %v1055, %v1047
    %v1096 = vpack.c.b16 %v1056, %v1048
    %v1097 = vpack.c.b16 %v1057, %v1049
    %v1098 = vpack.c.b16 %v1058, %v1050
    %v1099 = vpack.c.b16 %v1059, %v1051
    %v1100 = vpack.c.b16 %v1060, %v1052
    %v1101 = vpack.c.b16 %v1061, %v1053
    %v1102 = vpack.c.b16 %v1062, %v1054
    %v1103 = vpack.c.b16 %v1071, %v1063
    %v1104 = vpack.c.b16 %v1072, %v1064
    %v1105 = vpack.c.b16 %v1073, %v1065
    %v1106 = vpack.c.b16 %v1074, %v1066
    %v1107 = vpack.c.b16 %v1075, %v1067
    %v1108 = vpack.c.b16 %v1076, %v1068
    %v1109 = vpack.c.b16 %v1077, %v1069
    %v1110 = vpack.c.b16 %v1078, %v1070
    %v1144 = vsel %vm757, %v932, 0
    %1146 = vmatpush.bf16.msra.mxu0 0
    %1147 = vmatpush.bf16.msra.mxu0 0
    %1148 = vmatpush.bf16.msra.mxu0 0
    %1149 = vmatpush.bf16.msra.mxu0 0
    %1150 = vmatpush.bf16.msra.mxu0 %v1103
    %1151 = vmatpush.bf16.msra.mxu0 %v1095
    %1152 = vmatpush.bf16.msra.mxu0 %v1087
    %1153 = vmatpush.bf16.msra.mxu0 %v1079
    %1154 = vmatmul.bf16.gmra.mxu0 %v1144
    %v1155 = vpop.f32.mrf.mxu0
    %v1156 = vadd.f32 %v967, %v1155
    %v1157 = vpop.f32.mrf.mxu0
    %v1158 = vadd.f32 %v967, %v1157
    %1159 = vdwg.mxu0
    %1160 = vmatpush.bf16.msra.mxu0 0
    %1161 = vmatpush.bf16.msra.mxu0 0
    %1162 = vmatpush.bf16.msra.mxu0 0
    %1163 = vmatpush.bf16.msra.mxu0 0
    %1164 = vmatpush.bf16.msra.mxu0 %v1104
    %1165 = vmatpush.bf16.msra.mxu0 %v1096
    %1166 = vmatpush.bf16.msra.mxu0 %v1088
    %1167 = vmatpush.bf16.msra.mxu0 %v1080
    %1168 = vmatmul.bf16.gmra.mxu0 %v1144
    %v1169 = vpop.f32.mrf.mxu0
    %v1170 = vadd.f32 %v968, %v1169
    %v1171 = vpop.f32.mrf.mxu0
    %v1172 = vadd.f32 %v968, %v1171
    %1173 = vdwg.mxu0
    %1174 = vmatpush.bf16.msra.mxu0 0
    %1175 = vmatpush.bf16.msra.mxu0 0
    %1176 = vmatpush.bf16.msra.mxu0 0
    %1177 = vmatpush.bf16.msra.mxu0 0
    %1178 = vmatpush.bf16.msra.mxu0 %v1105
    %1179 = vmatpush.bf16.msra.mxu0 %v1097
    %1180 = vmatpush.bf16.msra.mxu0 %v1089
    %1181 = vmatpush.bf16.msra.mxu0 %v1081
    %1182 = vmatmul.bf16.gmra.mxu0 %v1144
    %v1183 = vpop.f32.mrf.mxu0
    %v1184 = vadd.f32 %v969, %v1183
    %v1185 = vpop.f32.mrf.mxu0
    %v1186 = vadd.f32 %v969, %v1185
    %1187 = vdwg.mxu0
    %1188 = vmatpush.bf16.msra.mxu0 0
    %1189 = vmatpush.bf16.msra.mxu0 0
    %1190 = vmatpush.bf16.msra.mxu0 0
    %1191 = vmatpush.bf16.msra.mxu0 0
    %1192 = vmatpush.bf16.msra.mxu0 %v1106
    %1193 = vmatpush.bf16.msra.mxu0 %v1098
    %1194 = vmatpush.bf16.msra.mxu0 %v1090
    %1195 = vmatpush.bf16.msra.mxu0 %v1082
    %1196 = vmatmul.bf16.gmra.mxu0 %v1144
    %v1197 = vpop.f32.mrf.mxu0
    %v1198 = vadd.f32 %v970, %v1197
    %v1199 = vpop.f32.mrf.mxu0
    %v1200 = vadd.f32 %v970, %v1199
    %1201 = vdwg.mxu0
    %1202 = vmatpush.bf16.msra.mxu0 0
    %1203 = vmatpush.bf16.msra.mxu0 0
    %1204 = vmatpush.bf16.msra.mxu0 0
    %1205 = vmatpush.bf16.msra.mxu0 0
    %1206 = vmatpush.bf16.msra.mxu0 %v1107
    %1207 = vmatpush.bf16.msra.mxu0 %v1099
    %1208 = vmatpush.bf16.msra.mxu0 %v1091
    %1209 = vmatpush.bf16.msra.mxu0 %v1083
    %1210 = vmatmul.bf16.gmra.mxu0 %v1144
    %v1211 = vpop.f32.mrf.mxu0
    %v1212 = vadd.f32 %v971, %v1211
    %v1213 = vpop.f32.mrf.mxu0
    %v1214 = vadd.f32 %v971, %v1213
    %1215 = vdwg.mxu0
    %1216 = vmatpush.bf16.msra.mxu0 0
    %1217 = vmatpush.bf16.msra.mxu0 0
    %1218 = vmatpush.bf16.msra.mxu0 0
    %1219 = vmatpush.bf16.msra.mxu0 0
    %1220 = vmatpush.bf16.msra.mxu0 %v1108
    %1221 = vmatpush.bf16.msra.mxu0 %v1100
    %1222 = vmatpush.bf16.msra.mxu0 %v1092
    %1223 = vmatpush.bf16.msra.mxu0 %v1084
    %1224 = vmatmul.bf16.gmra.mxu0 %v1144
    %v1225 = vpop.f32.mrf.mxu0
    %v1226 = vadd.f32 %v972, %v1225
    %v1227 = vpop.f32.mrf.mxu0
    %v1228 = vadd.f32 %v972, %v1227
    %1229 = vdwg.mxu0
    %1230 = vmatpush.bf16.msra.mxu0 0
    %1231 = vmatpush.bf16.msra.mxu0 0
    %1232 = vmatpush.bf16.msra.mxu0 0
    %1233 = vmatpush.bf16.msra.mxu0 0
    %1234 = vmatpush.bf16.msra.mxu0 %v1109
    %1235 = vmatpush.bf16.msra.mxu0 %v1101
    %1236 = vmatpush.bf16.msra.mxu0 %v1093
    %1237 = vmatpush.bf16.msra.mxu0 %v1085
    %1238 = vmatmul.bf16.gmra.mxu0 %v1144
    %v1239 = vpop.f32.mrf.mxu0
    %v1240 = vadd.f32 %v973, %v1239
    %v1241 = vpop.f32.mrf.mxu0
    %v1242 = vadd.f32 %v973, %v1241
    %1243 = vdwg.mxu0
    %1244 = vmatpush.bf16.msra.mxu0 0
    %1245 = vmatpush.bf16.msra.mxu0 0
    %1246 = vmatpush.bf16.msra.mxu0 0
    %1247 = vmatpush.bf16.msra.mxu0 0
    %1248 = vmatpush.bf16.msra.mxu0 %v1110
    %1249 = vmatpush.bf16.msra.mxu0 %v1102
    %1250 = vmatpush.bf16.msra.mxu0 %v1094
    %1251 = vmatpush.bf16.msra.mxu0 %v1086
    %1252 = vmatmul.bf16.gmra.mxu0 %v1144
    %v1253 = vpop.f32.mrf.mxu0
    %v1254 = vadd.f32 %v974, %v1253
    %v1255 = vpop.f32.mrf.mxu0
    %v1256 = vadd.f32 %v974, %v1255
    %1257 = vdwg.mxu0
    %v1258 = vxor.u32 %v1156, 2147483648
    %v1259 = vxor.u32 %v1170, 2147483648
    %v1260 = vxor.u32 %v1184, 2147483648
    %v1261 = vxor.u32 %v1198, 2147483648
    %v1262 = vxor.u32 %v1212, 2147483648
    %v1263 = vxor.u32 %v1226, 2147483648
    %v1264 = vxor.u32 %v1240, 2147483648
    %v1265 = vxor.u32 %v1254, 2147483648
    %v1266 = vxor.u32 %v1158, 2147483648
    %v1267 = vxor.u32 %v1172, 2147483648
    %v1268 = vxor.u32 %v1186, 2147483648
    %v1269 = vxor.u32 %v1200, 2147483648
    %v1270 = vxor.u32 %v1214, 2147483648
    %v1271 = vxor.u32 %v1228, 2147483648
    %v1272 = vxor.u32 %v1242, 2147483648
    %v1273 = vxor.u32 %v1256, 2147483648
    %v1274 = vmul.f32 %v1258, 1.442695
    %v1275 = vpow.pop %v1274
    %v1276 = vmul.f32 %v1259, 1.442695
    %v1277 = vpow.pop %v1276
    %v1278 = vmul.f32 %v1260, 1.442695
    %v1279 = vpow.pop %v1278
    %v1280 = vmul.f32 %v1261, 1.442695
    %v1281 = vpow.pop %v1280
    %v1282 = vmul.f32 %v1262, 1.442695
    %v1283 = vpow.pop %v1282
    %v1284 = vmul.f32 %v1263, 1.442695
    %v1285 = vpow.pop %v1284
    %v1286 = vmul.f32 %v1264, 1.442695
    %v1287 = vpow.pop %v1286
    %v1288 = vmul.f32 %v1265, 1.442695
    %v1289 = vpow.pop %v1288
    %v1290 = vmul.f32 %v1266, 1.442695
    %v1291 = vpow.pop %v1290
    %v1292 = vmul.f32 %v1267, 1.442695
    %v1293 = vpow.pop %v1292
    %v1294 = vmul.f32 %v1268, 1.442695
    %v1295 = vpow.pop %v1294
    %v1296 = vmul.f32 %v1269, 1.442695
    %v1297 = vpow.pop %v1296
    %v1298 = vmul.f32 %v1270, 1.442695
    %v1299 = vpow.pop %v1298
    %v1300 = vmul.f32 %v1271, 1.442695
    %v1301 = vpow.pop %v1300
    %v1302 = vmul.f32 %v1272, 1.442695
    %v1303 = vpow.pop %v1302
    %v1304 = vmul.f32 %v1273, 1.442695
    %v1305 = vpow.pop %v1304
    %v1306 = vadd.f32 %v1275, 1.0
    %v1307 = vadd.f32 %v1277, 1.0
    %v1308 = vadd.f32 %v1279, 1.0
    %v1309 = vadd.f32 %v1281, 1.0
    %v1310 = vadd.f32 %v1283, 1.0
    %v1311 = vadd.f32 %v1285, 1.0
    %v1312 = vadd.f32 %v1287, 1.0
    %v1313 = vadd.f32 %v1289, 1.0
    %v1314 = vadd.f32 %v1291, 1.0
    %v1315 = vadd.f32 %v1293, 1.0
    %v1316 = vadd.f32 %v1295, 1.0
    %v1317 = vadd.f32 %v1297, 1.0
    %v1318 = vadd.f32 %v1299, 1.0
    %v1319 = vadd.f32 %v1301, 1.0
    %v1320 = vadd.f32 %v1303, 1.0
    %v1321 = vadd.f32 %v1305, 1.0
    %v1322 = vrcp.pop %v1306
    %v1323 = vmul.f32 %v1306, %v1322
    %v1324 = vsub.f32 1.0, %v1323
    %v1325 = vmul.f32 %v1322, %v1324
    %v1326 = vadd.f32 %v1322, %v1325
    %vm1327 = vweird.f32 %v1306
    %vm1328 = vweird.f32 %v1322
    %vm1329 = vmor %vm1327, %vm1328
    %v1330 = vsel %vm1329, %v1322, %v1326
    %v1331 = vand.u32 2147483647, %v1306
    %vm1332 = vcmp.eq.f32.partialorder %v1331, 8.507059e+37
    %v1333 = vand.u32 %v1306, 2147483648
    %v1334 = vor.u32 1.1754944e-38, %v1333
    %v1335 = vsel %vm1332, %v1334, %v1330
    %v1336 = vmul.f32 1.0, %v1335
    %v1337 = vrcp.pop %v1307
    %v1338 = vmul.f32 %v1307, %v1337
    %v1339 = vsub.f32 1.0, %v1338
    %v1340 = vmul.f32 %v1337, %v1339
    %v1341 = vadd.f32 %v1337, %v1340
    %vm1342 = vweird.f32 %v1307
    %vm1343 = vweird.f32 %v1337
    %vm1344 = vmor %vm1342, %vm1343
    %v1345 = vsel %vm1344, %v1337, %v1341
    %v1346 = vand.u32 2147483647, %v1307
    %vm1347 = vcmp.eq.f32.partialorder %v1346, 8.507059e+37
    %v1348 = vand.u32 %v1307, 2147483648
    %v1349 = vor.u32 1.1754944e-38, %v1348
    %v1350 = vsel %vm1347, %v1349, %v1345
    %v1351 = vmul.f32 1.0, %v1350
    %v1352 = vrcp.pop %v1308
    %v1353 = vmul.f32 %v1308, %v1352
    %v1354 = vsub.f32 1.0, %v1353
    %v1355 = vmul.f32 %v1352, %v1354
    %v1356 = vadd.f32 %v1352, %v1355
    %vm1357 = vweird.f32 %v1308
    %vm1358 = vweird.f32 %v1352
    %vm1359 = vmor %vm1357, %vm1358
    %v1360 = vsel %vm1359, %v1352, %v1356
    %v1361 = vand.u32 2147483647, %v1308
    %vm1362 = vcmp.eq.f32.partialorder %v1361, 8.507059e+37
    %v1363 = vand.u32 %v1308, 2147483648
    %v1364 = vor.u32 1.1754944e-38, %v1363
    %v1365 = vsel %vm1362, %v1364, %v1360
    %v1366 = vmul.f32 1.0, %v1365
    %v1367 = vrcp.pop %v1309
    %v1368 = vmul.f32 %v1309, %v1367
    %v1369 = vsub.f32 1.0, %v1368
    %v1370 = vmul.f32 %v1367, %v1369
    %v1371 = vadd.f32 %v1367, %v1370
    %vm1372 = vweird.f32 %v1309
    %vm1373 = vweird.f32 %v1367
    %vm1374 = vmor %vm1372, %vm1373
    %v1375 = vsel %vm1374, %v1367, %v1371
    %v1376 = vand.u32 2147483647, %v1309
    %vm1377 = vcmp.eq.f32.partialorder %v1376, 8.507059e+37
    %v1378 = vand.u32 %v1309, 2147483648
    %v1379 = vor.u32 1.1754944e-38, %v1378
    %v1380 = vsel %vm1377, %v1379, %v1375
    %v1381 = vmul.f32 1.0, %v1380
    %v1382 = vrcp.pop %v1310
    %v1383 = vmul.f32 %v1310, %v1382
    %v1384 = vsub.f32 1.0, %v1383
    %v1385 = vmul.f32 %v1382, %v1384
    %v1386 = vadd.f32 %v1382, %v1385
    %vm1387 = vweird.f32 %v1310
    %vm1388 = vweird.f32 %v1382
    %vm1389 = vmor %vm1387, %vm1388
    %v1390 = vsel %vm1389, %v1382, %v1386
    %v1391 = vand.u32 2147483647, %v1310
    %vm1392 = vcmp.eq.f32.partialorder %v1391, 8.507059e+37
    %v1393 = vand.u32 %v1310, 2147483648
    %v1394 = vor.u32 1.1754944e-38, %v1393
    %v1395 = vsel %vm1392, %v1394, %v1390
    %v1396 = vmul.f32 1.0, %v1395
    %v1397 = vrcp.pop %v1311
    %v1398 = vmul.f32 %v1311, %v1397
    %v1399 = vsub.f32 1.0, %v1398
    %v1400 = vmul.f32 %v1397, %v1399
    %v1401 = vadd.f32 %v1397, %v1400
    %vm1402 = vweird.f32 %v1311
    %vm1403 = vweird.f32 %v1397
    %vm1404 = vmor %vm1402, %vm1403
    %v1405 = vsel %vm1404, %v1397, %v1401
    %v1406 = vand.u32 2147483647, %v1311
    %vm1407 = vcmp.eq.f32.partialorder %v1406, 8.507059e+37
    %v1408 = vand.u32 %v1311, 2147483648
    %v1409 = vor.u32 1.1754944e-38, %v1408
    %v1410 = vsel %vm1407, %v1409, %v1405
    %v1411 = vmul.f32 1.0, %v1410
    %v1412 = vrcp.pop %v1312
    %v1413 = vmul.f32 %v1312, %v1412
    %v1414 = vsub.f32 1.0, %v1413
    %v1415 = vmul.f32 %v1412, %v1414
    %v1416 = vadd.f32 %v1412, %v1415
    %vm1417 = vweird.f32 %v1312
    %vm1418 = vweird.f32 %v1412
    %vm1419 = vmor %vm1417, %vm1418
    %v1420 = vsel %vm1419, %v1412, %v1416
    %v1421 = vand.u32 2147483647, %v1312
    %vm1422 = vcmp.eq.f32.partialorder %v1421, 8.507059e+37
    %v1423 = vand.u32 %v1312, 2147483648
    %v1424 = vor.u32 1.1754944e-38, %v1423
    %v1425 = vsel %vm1422, %v1424, %v1420
    %v1426 = vmul.f32 1.0, %v1425
    %v1427 = vrcp.pop %v1313
    %v1428 = vmul.f32 %v1313, %v1427
    %v1429 = vsub.f32 1.0, %v1428
    %v1430 = vmul.f32 %v1427, %v1429
    %v1431 = vadd.f32 %v1427, %v1430
    %vm1432 = vweird.f32 %v1313
    %vm1433 = vweird.f32 %v1427
    %vm1434 = vmor %vm1432, %vm1433
    %v1435 = vsel %vm1434, %v1427, %v1431
    %v1436 = vand.u32 2147483647, %v1313
    %vm1437 = vcmp.eq.f32.partialorder %v1436, 8.507059e+37
    %v1438 = vand.u32 %v1313, 2147483648
    %v1439 = vor.u32 1.1754944e-38, %v1438
    %v1440 = vsel %vm1437, %v1439, %v1435
    %v1441 = vmul.f32 1.0, %v1440
    %v1442 = vrcp.pop %v1314
    %v1443 = vmul.f32 %v1314, %v1442
    %v1444 = vsub.f32 1.0, %v1443
    %v1445 = vmul.f32 %v1442, %v1444
    %v1446 = vadd.f32 %v1442, %v1445
    %vm1447 = vweird.f32 %v1314
    %vm1448 = vweird.f32 %v1442
    %vm1449 = vmor %vm1447, %vm1448
    %v1450 = vsel %vm1449, %v1442, %v1446
    %v1451 = vand.u32 2147483647, %v1314
    %vm1452 = vcmp.eq.f32.partialorder %v1451, 8.507059e+37
    %v1453 = vand.u32 %v1314, 2147483648
    %v1454 = vor.u32 1.1754944e-38, %v1453
    %v1455 = vsel %vm1452, %v1454, %v1450
    %v1456 = vmul.f32 1.0, %v1455
    %v1457 = vrcp.pop %v1315
    %v1458 = vmul.f32 %v1315, %v1457
    %v1459 = vsub.f32 1.0, %v1458
    %v1460 = vmul.f32 %v1457, %v1459
    %v1461 = vadd.f32 %v1457, %v1460
    %vm1462 = vweird.f32 %v1315
    %vm1463 = vweird.f32 %v1457
    %vm1464 = vmor %vm1462, %vm1463
    %v1465 = vsel %vm1464, %v1457, %v1461
    %v1466 = vand.u32 2147483647, %v1315
    %vm1467 = vcmp.eq.f32.partialorder %v1466, 8.507059e+37
    %v1468 = vand.u32 %v1315, 2147483648
    %v1469 = vor.u32 1.1754944e-38, %v1468
    %v1470 = vsel %vm1467, %v1469, %v1465
    %v1471 = vmul.f32 1.0, %v1470
    %v1472 = vrcp.pop %v1316
    %v1473 = vmul.f32 %v1316, %v1472
    %v1474 = vsub.f32 1.0, %v1473
    %v1475 = vmul.f32 %v1472, %v1474
    %v1476 = vadd.f32 %v1472, %v1475
    %vm1477 = vweird.f32 %v1316
    %vm1478 = vweird.f32 %v1472
    %vm1479 = vmor %vm1477, %vm1478
    %v1480 = vsel %vm1479, %v1472, %v1476
    %v1481 = vand.u32 2147483647, %v1316
    %vm1482 = vcmp.eq.f32.partialorder %v1481, 8.507059e+37
    %v1483 = vand.u32 %v1316, 2147483648
    %v1484 = vor.u32 1.1754944e-38, %v1483
    %v1485 = vsel %vm1482, %v1484, %v1480
    %v1486 = vmul.f32 1.0, %v1485
    %v1487 = vrcp.pop %v1317
    %v1488 = vmul.f32 %v1317, %v1487
    %v1489 = vsub.f32 1.0, %v1488
    %v1490 = vmul.f32 %v1487, %v1489
    %v1491 = vadd.f32 %v1487, %v1490
    %vm1492 = vweird.f32 %v1317
    %vm1493 = vweird.f32 %v1487
    %vm1494 = vmor %vm1492, %vm1493
    %v1495 = vsel %vm1494, %v1487, %v1491
    %v1496 = vand.u32 2147483647, %v1317
    %vm1497 = vcmp.eq.f32.partialorder %v1496, 8.507059e+37
    %v1498 = vand.u32 %v1317, 2147483648
    %v1499 = vor.u32 1.1754944e-38, %v1498
    %v1500 = vsel %vm1497, %v1499, %v1495
    %v1501 = vmul.f32 1.0, %v1500
    %v1502 = vrcp.pop %v1318
    %v1503 = vmul.f32 %v1318, %v1502
    %v1504 = vsub.f32 1.0, %v1503
    %v1505 = vmul.f32 %v1502, %v1504
    %v1506 = vadd.f32 %v1502, %v1505
    %vm1507 = vweird.f32 %v1318
    %vm1508 = vweird.f32 %v1502
    %vm1509 = vmor %vm1507, %vm1508
    %v1510 = vsel %vm1509, %v1502, %v1506
    %v1511 = vand.u32 2147483647, %v1318
    %vm1512 = vcmp.eq.f32.partialorder %v1511, 8.507059e+37
    %v1513 = vand.u32 %v1318, 2147483648
    %v1514 = vor.u32 1.1754944e-38, %v1513
    %v1515 = vsel %vm1512, %v1514, %v1510
    %v1516 = vmul.f32 1.0, %v1515
    %v1517 = vrcp.pop %v1319
    %v1518 = vmul.f32 %v1319, %v1517
    %v1519 = vsub.f32 1.0, %v1518
    %v1520 = vmul.f32 %v1517, %v1519
    %v1521 = vadd.f32 %v1517, %v1520
    %vm1522 = vweird.f32 %v1319
    %vm1523 = vweird.f32 %v1517
    %vm1524 = vmor %vm1522, %vm1523
    %v1525 = vsel %vm1524, %v1517, %v1521
    %v1526 = vand.u32 2147483647, %v1319
    %vm1527 = vcmp.eq.f32.partialorder %v1526, 8.507059e+37
    %v1528 = vand.u32 %v1319, 2147483648
    %v1529 = vor.u32 1.1754944e-38, %v1528
    %v1530 = vsel %vm1527, %v1529, %v1525
    %v1531 = vmul.f32 1.0, %v1530
    %v1532 = vrcp.pop %v1320
    %v1533 = vmul.f32 %v1320, %v1532
    %v1534 = vsub.f32 1.0, %v1533
    %v1535 = vmul.f32 %v1532, %v1534
    %v1536 = vadd.f32 %v1532, %v1535
    %vm1537 = vweird.f32 %v1320
    %vm1538 = vweird.f32 %v1532
    %vm1539 = vmor %vm1537, %vm1538
    %v1540 = vsel %vm1539, %v1532, %v1536
    %v1541 = vand.u32 2147483647, %v1320
    %vm1542 = vcmp.eq.f32.partialorder %v1541, 8.507059e+37
    %v1543 = vand.u32 %v1320, 2147483648
    %v1544 = vor.u32 1.1754944e-38, %v1543
    %v1545 = vsel %vm1542, %v1544, %v1540
    %v1546 = vmul.f32 1.0, %v1545
    %v1547 = vrcp.pop %v1321
    %v1548 = vmul.f32 %v1321, %v1547
    %v1549 = vsub.f32 1.0, %v1548
    %v1550 = vmul.f32 %v1547, %v1549
    %v1551 = vadd.f32 %v1547, %v1550
    %vm1552 = vweird.f32 %v1321
    %vm1553 = vweird.f32 %v1547
    %vm1554 = vmor %vm1552, %vm1553
    %v1555 = vsel %vm1554, %v1547, %v1551
    %v1556 = vand.u32 2147483647, %v1321
    %vm1557 = vcmp.eq.f32.partialorder %v1556, 8.507059e+37
    %v1558 = vand.u32 %v1321, 2147483648
    %v1559 = vor.u32 1.1754944e-38, %v1558
    %v1560 = vsel %vm1557, %v1559, %v1555
    %v1561 = vmul.f32 1.0, %v1560
    %v1562 = vpack.c.bf16 %v1351, %v1336
    %v1563 = vpack.c.bf16 %v1381, %v1366
    %v1564 = vpack.c.bf16 %v1411, %v1396
    %v1565 = vpack.c.bf16 %v1441, %v1426
    %v1566 = vpack.c.bf16 %v1471, %v1456
    %v1567 = vpack.c.bf16 %v1501, %v1486
    %v1568 = vpack.c.bf16 %v1531, %v1516
    %v1569 = vpack.c.bf16 %v1561, %v1546
    %1570 = vst [vmem:[#allocation2] sm:$0xff] %v1562
    %1571 = vst [vmem:[#allocation2 + $0x8] sm:$0xff] %v1563
    %1572 = vst [vmem:[#allocation2 + $0x10] sm:$0xff] %v1564
    %1573 = vst [vmem:[#allocation2 + $0x18] sm:$0xff] %v1565
    %1574 = vst [vmem:[#allocation2 + $0x20] sm:$0xff] %v1566
    %1575 = vst [vmem:[#allocation2 + $0x28] sm:$0xff] %v1567
    %1576 = vst [vmem:[#allocation2 + $0x30] sm:$0xff] %v1568
    %1577 = vst [vmem:[#allocation2 + $0x38] sm:$0xff] %v1569
    %v1578 = vlaneseq
    %v1579 = vand.u32 %v1578, 127
    %1580 = vrot.lane.b32.xlu0 %v817, 8
    %v1581 = vpop.permute.xlu0 %1580
    %1582 = vrot.lane.b32.xlu0 %v818, 8
    %v1583 = vpop.permute.xlu0 %1582
    %1584 = vrot.lane.b32.xlu0 %v845, 16
    %v1585 = vpop.permute.xlu0 %1584
    %1586 = vrot.lane.b32.xlu0 %v846, 16
    %v1587 = vpop.permute.xlu0 %1586
    %vm1588 = vcmp.lt.s32.totalorder %v1579, 8
    %vm1589 = vcmp.lt.s32.totalorder %v1579, 16
    %vm1590 = vcmp.lt.s32.totalorder %v1579, 24
    %v1591 = vsel %vm1590, %v1585, 0.0
    %v1592 = vsel %vm1590, %v1587, 0.0
    %v1593 = vsel %vm1589, %v1581, %v1591
    %v1594 = vsel %vm1589, %v1583, %v1592
    %v1595 = vsel %vm1588, %v771, %v1593
    %v1596 = vsel %vm1588, %v773, %v1594
    %1597 = vst [vmem:[#allocation4] sm:$0xff] %v1595
    %1598 = vst [vmem:[#allocation4 + $0x8] sm:$0xff] %v1596
    // Predicated region
    $region42: #{tpu_custom_call.1} parent=1 // pred_check
      _
    $region43: #{tpu_custom_call.1} parent=1 // pred_check_branch
      %1600 = sbr.rel (0) target = $region45
    $region44: #{tpu_custom_call.1} parent=1 // pred_region
      %1602 = vsyncadd [#allocation3], 0
      %s1603 = sshll.u32 [#allocation2], 4
      %s1604 = int_to_ptr.vmem [resolvable:$true] %s1603
      %s1605 = sshll.u32 %s10, 4
      %s1606 = int_to_ptr.hbm [resolvable:$true] %s1605
      %1611 = dma.vmem_to_hbm [thread:$0]  %s1604, 1024, %s1606, [#allocation3], 512, 512, 32
    $region45: #{tpu_custom_call.1} parent=1 // pred_fallthru
      _
    // Predicated region
    $region46: #{tpu_custom_call.1} parent=1 // pred_check
      _
    $region47: #{tpu_custom_call.1} parent=1 // pred_check_branch
      %1613 = sbr.rel (0) target = $region49
    $region48: #{tpu_custom_call.1} parent=1 // pred_region
      %1615 = vsyncadd [#allocation5], 0
      %s1616 = sshll.u32 [#allocation4], 4
      %s1617 = int_to_ptr.vmem [resolvable:$true] %s1616
      %s1618 = sshll.u32 %s11, 4
      %s1619 = int_to_ptr.hbm [resolvable:$true] %s1618
      %1624 = dma.vmem_to_hbm [thread:$0]  %s1617, 256, %s1619, [#allocation5], 128, 128, 8
    $region49: #{tpu_custom_call.1} parent=1 // pred_fallthru
      _
    // Predicated region
    $region50: #{tpu_custom_call.1} parent=1 // pred_check
      _
    $region51: #{tpu_custom_call.1} parent=1 // pred_check_branch
      %1626 = sbr.rel (0) target = $region53
    $region52: #{tpu_custom_call.1} parent=1 // pred_region
      %1628 = dma.done [#allocation3], 1024
    $region53: #{tpu_custom_call.1} parent=1 // pred_fallthru
      _
    // Predicated region
    $region54: #{tpu_custom_call.1} parent=1 // pred_check
      _
    $region55: #{tpu_custom_call.1} parent=1 // pred_check_branch
      %1630 = sbr.rel (0) target = $region57
    $region56: #{tpu_custom_call.1} parent=1 // pred_region
      %1632 = dma.done [#allocation5], 256
    $region57: #{tpu_custom_call.1} parent=1 // pred_fallthru
      _
    %1633 = vsyncpa [#allocation3], 1
    %1634 = vsyncpa [#allocation5], 1

</llo_original>
